<compile_context>
chip_gen: v6e
topology: v6e:2x2x1
jax: 0.10.0
libtpu: 0.0.40
codegen_flags: <defaults>
</compile_context>

<pallas_src>
import functools
import math

import jax
import jax.numpy as jnp
from jax.experimental import pallas as pl
from jax.experimental.pallas import tpu as pltpu

EPS = 1e-5
LANE = 128
N_CLASSES = 17

ENCODER_SPECS = [[1, 48, 2], [1, 96, 4], [1, 192, 8], [1, 192, 16]]
DECODER_SPECS = [[1, 96, 8], [1, 96, 4], [1, 48, 2]]


def _rup(c, m=LANE):
    return ((c + m - 1) // m) * m


# ----------------------------------------------------------------------------
# Trace-time parameter folding / lane-layout helpers (small arrays only)
# ----------------------------------------------------------------------------
def _fold_bn(p, segs):
    """Fold eval-mode BatchNorm into per-channel scale/shift, laid out lane-padded.

    segs: list of (real, padded) channel-segment sizes describing where the real
    channels sit inside the lane-padded input.  Padded lanes get s = t = 0 so
    relu(0*0 + 0) = 0 keeps them exactly zero.
    """
    s = p['gamma'] * jax.lax.rsqrt(p['var'] + EPS)
    t = p['beta'] - p['mean'] * s
    s_parts, t_parts, off = [], [], 0
    for real, padded in segs:
        s_parts.append(jnp.pad(s[:, off:off + real], ((0, 0), (0, padded - real))))
        t_parts.append(jnp.pad(t[:, off:off + real], ((0, 0), (0, padded - real))))
        off += real
    if len(s_parts) == 1:
        return s_parts[0], t_parts[0]
    return jnp.concatenate(s_parts, axis=1), jnp.concatenate(t_parts, axis=1)


def _place_weight(w, segs, cout_p):
    """Scatter real conv weights (..., cin_real, cout) into the lane-padded
    (..., cin_padded_total, cout_p) layout (zeros elsewhere)."""
    cout = w.shape[-1]
    prefix = [(0, 0)] * (w.ndim - 2)
    parts, off = [], 0
    for real, padded in segs:
        seg = w[..., off:off + real, :]
        seg = jnp.pad(seg, prefix + [(0, padded - real), (0, cout_p - cout)])
        parts.append(seg)
        off += real
    if len(parts) == 1:
        return parts[0]
    return jnp.concatenate(parts, axis=-2)


def _pick_th(H, W, cin, cout_p, budget=2 * 1024 * 1024):
    """Largest power-of-two row tile (dividing H) whose VMEM working set fits the budget."""
    th = H

    def footprint(t):
        halo_rows = (t + 2) * (W + 2) * cin
        return (3 * halo_rows * 4                 # pipelined input blocks + assembled copy (f32)
                + (t + 2) * W * 3 * cin * 2       # kw-collapsed activation (bf16)
                + 3 * t * W * cout_p * 4)         # f32 accumulator + double-buffered output

    while th > 2 and th % 2 == 0 and footprint(th) > budget:
        th //= 2
    return th


def _pick_tm(M, target=1024):
    """Row-tile for the flattened 1x1-conv matmul (multiple of 8, divides M)."""
    if M <= target:
        return M
    for tm in range(target, 7, -8):
        if M % tm == 0:
            return tm
    return M


# ----------------------------------------------------------------------------
# Pallas kernels
# ----------------------------------------------------------------------------
def _conv3x3_kernel(s_ref, t_ref, w_ref, b_ref, xm_ref, h1_ref, h2_ref, o_ref,
                    *, TH, H, W, cin, cout_p):
    """BN(eval)->ReLU->3x3 conv (pad=1, stride=1) for one (batch, row-tile) block.

    xm_ref: (1, TH, W+2, cin) main rows of the spatially zero-padded input.
    h1/h2 : (1, 1,  W+2, cin) the two halo rows below the main block.
    """
    i = pl.program_id(1)
    x = jnp.concatenate([xm_ref[0], h1_ref[0], h2_ref[0]], axis=0)     # (TH+2, W+2, cin)
    x = x.astype(jnp.float32)
    act = jnp.maximum(x * s_ref[...] + t_ref[...], 0.0)
    # Re-zero the spatial zero-padding (BN shift would make it nonzero otherwise).
    row = jax.lax.broadcasted_iota(jnp.int32, (TH + 2, 1, 1), 0) + i * TH
    col = jax.lax.broadcasted_iota(jnp.int32, (1, W + 2, 1), 1)
    valid = (row >= 1) & (row <= H) & (col >= 1) & (col <= W)
    act = jnp.where(valid, act, 0.0).astype(jnp.bfloat16)
    # Collapse kw into the contraction: (TH+2, W, 3*cin).
    a3 = jnp.concatenate([act[:, 0:W], act[:, 1:W + 1], act[:, 2:W + 2]], axis=-1)

    acc = jnp.zeros((TH * W, cout_p), jnp.float32)
    for kh in range(3):
        win = a3[kh:kh + TH].reshape(TH * W, 3 * cin)
        acc = acc + jnp.dot(win, w_ref[kh], preferred_element_type=jnp.float32)
    out = acc + b_ref[...]
    o_ref[0] = out.reshape(TH, W, cout_p).astype(o_ref.dtype)


def _conv1x1_kernel(*refs, bnrelu, has_res):
    """[BN(eval)->ReLU] -> 1x1 conv [-> + residual] on a (TM, cin) row block."""
    it = iter(refs)
    x_ref = next(it)
    if bnrelu:
        s_ref, t_ref = next(it), next(it)
    w_ref, b_ref = next(it), next(it)
    res_ref = next(it) if has_res else None
    o_ref = next(it)

    x = x_ref[...].astype(jnp.float32)
    if bnrelu:
        x = jnp.maximum(x * s_ref[...] + t_ref[...], 0.0)
    acc = jnp.dot(x.astype(jnp.bfloat16), w_ref[...],
                  preferred_element_type=jnp.float32)
    acc = acc + b_ref[...]
    if has_res:
        acc = acc + res_ref[...].astype(jnp.float32)
    o_ref[...] = acc.astype(o_ref.dtype)


# ----------------------------------------------------------------------------
# Pallas wrappers (lane-padded NHWC in, lane-padded NHWC out)
# ----------------------------------------------------------------------------
def conv3x3_bnrelu(x, p, *, segs=None, row_tile=None):
    """x: (N, H, W, cin_padded) -> (N, H, W, round_up(cout, 128))."""
    N, H, W, cin_pad = x.shape
    cout = p['w'].shape[3]
    cout_p = _rup(cout)
    if segs is None:
        segs = [(p['w'].shape[2], cin_pad)]
    assert sum(pd for _, pd in segs) == cin_pad
    assert sum(r for r, _ in segs) == p['w'].shape[2]

    s, t = _fold_bn(p, segs)                                        # (1, cin_pad) f32
    w = _place_weight(p['w'], segs, cout_p)                         # (3, 3, cin_pad, cout_p)
    w = w.reshape(3, 3 * cin_pad, cout_p).astype(jnp.bfloat16)
    b = jnp.pad(p['b'], ((0, 0), (0, cout_p - cout)))

    # TODO(synk): the 1-pixel spatial halo is still materialized with one jnp.pad (an extra
    # HBM pass); it could be moved in-kernel with clamped halo index_maps + edge masks.
    xp = jnp.pad(x, ((0, 0), (1, 1), (1, 1), (0, 0)))
    Wp = W + 2

    TH = row_tile if row_tile is not None else _pick_th(H, W, cin_pad, cout_p)
    assert H % TH == 0
    grid = (N, H // TH)

    kern = functools.partial(_conv3x3_kernel, TH=TH, H=H, W=W,
                             cin=cin_pad, cout_p=cout_p)
    return pl.pallas_call(
        kern,
        out_shape=jax.ShapeDtypeStruct((N, H, W, cout_p), jnp.float32),
        grid=grid,
        in_specs=[
            pl.BlockSpec((1, cin_pad), lambda n, i: (0, 0)),                     # scale
            pl.BlockSpec((1, cin_pad), lambda n, i: (0, 0)),                     # shift
            pl.BlockSpec((3, 3 * cin_pad, cout_p), lambda n, i: (0, 0, 0)),      # weights
            pl.BlockSpec((1, cout_p), lambda n, i: (0, 0)),                      # bias
            # main row block + two 1-row halo blocks of the same padded input
            pl.BlockSpec((1, TH, Wp, cin_pad), lambda n, i: (n, i, 0, 0)),
            pl.BlockSpec((1, 1, Wp, cin_pad), lambda n, i: (n, i * TH + TH, 0, 0)),
            pl.BlockSpec((1, 1, Wp, cin_pad), lambda n, i: (n, i * TH + TH + 1, 0, 0)),
        ],
        out_specs=pl.BlockSpec((1, TH, W, cout_p), lambda n, i: (n, i, 0, 0)),
        compiler_params=pltpu.CompilerParams(
            dimension_semantics=("parallel", "parallel"),
            vmem_limit_bytes=32 * 1024 * 1024),
    )(s, t, w, b, xp, xp, xp)


def conv1x1(x, p, *, segs=None, bnrelu=True, residual=None, m_tile=None):
    """x: (N, H, W, cin_padded) -> (N, H, W, round_up(cout, 128)).

    Optional fused BN->ReLU on the input and fused residual add on the output
    (residual must already be lane-padded to round_up(cout, 128))."""
    N, H, W, cin_pad = x.shape
    cout = p['w'].shape[1]
    cout_p = _rup(cout)
    if segs is None:
        segs = [(p['w'].shape[0], cin_pad)]
    assert sum(pd for _, pd in segs) == cin_pad
    assert sum(r for r, _ in segs) == p['w'].shape[0]

    w = _place_weight(p['w'], segs, cout_p).astype(jnp.bfloat16)     # (cin_pad, cout_p)
    b = jnp.pad(p['b'], ((0, 0), (0, cout_p - cout)))

    M = N * H * W
    x2 = x.reshape(M, cin_pad)
    TM = m_tile if m_tile is not None else _pick_tm(M)
    assert M % TM == 0

    args = [x2]
    in_specs = [pl.BlockSpec((TM, cin_pad), lambda i: (i, 0))]
    if bnrelu:
        s, t = _fold_bn(p, segs)
        args += [s, t]
        in_specs += [pl.BlockSpec((1, cin_pad), lambda i: (0, 0)),
                     pl.BlockSpec((1, cin_pad), lambda i: (0, 0))]
    args += [w, b]
    in_specs += [pl.BlockSpec((cin_pad, cout_p), lambda i: (0, 0)),
                 pl.BlockSpec((1, cout_p), lambda i: (0, 0))]
    if residual is not None:
        assert residual.shape == (N, H, W, cout_p)
        args.append(residual.reshape(M, cout_p))
        in_specs.append(pl.BlockSpec((TM, cout_p), lambda i: (i, 0)))

    kern = functools.partial(_conv1x1_kernel, bnrelu=bnrelu,
                             has_res=residual is not None)
    out = pl.pallas_call(
        kern,
        out_shape=jax.ShapeDtypeStruct((M, cout_p), jnp.float32),
        grid=(M // TM,),
        in_specs=in_specs,
        out_specs=pl.BlockSpec((TM, cout_p), lambda i: (i, 0)),
        compiler_params=pltpu.CompilerParams(
            dimension_semantics=("parallel",),
            vmem_limit_bytes=32 * 1024 * 1024),
    )(*args)
    return out.reshape(N, H, W, cout_p)


# ----------------------------------------------------------------------------
# Plain-JAX glue (pooling / resizing) -- channel-agnostic, zero lanes stay zero
# ----------------------------------------------------------------------------
def maxpool(x, s):
    N, H, W, C = x.shape
    return x.reshape(N, H // s, s, W // s, s, C).max(axis=(2, 4))


def nearest_up(x, s):
    return jnp.repeat(jnp.repeat(x, s, axis=1), s, axis=2)


def bilinear_ac(x, oh, ow):
    """F.interpolate(..., mode='bilinear', align_corners=True)."""
    N, H, W, C = x.shape

    def coords(insz, outsz):
        if insz == 1:
            src = jnp.zeros((outsz,), jnp.float32)
        else:
            src = jnp.arange(outsz, dtype=jnp.float32) * (insz - 1) / (outsz - 1)
        i0 = jnp.clip(jnp.floor(src).astype(jnp.int32), 0, insz - 1)
        i1 = jnp.clip(i0 + 1, 0, insz - 1)
        frac = src - i0.astype(jnp.float32)
        return i0, i1, frac

    r0, r1, rw = coords(H, oh)
    c0, c1, cw = coords(W, ow)
    top = jnp.take(x, r0, axis=1)
    bot = jnp.take(x, r1, axis=1)
    xr = top * (1.0 - rw)[None, :, None, None] + bot * rw[None, :, None, None]
    left = jnp.take(xr, c0, axis=2)
    right = jnp.take(xr, c1, axis=2)
    return left * (1.0 - cw)[None, None, :, None] + right * cw[None, None, :, None]


# ----------------------------------------------------------------------------
# Network modules (Pallas path; channels lane-padded to multiples of 128)
# ----------------------------------------------------------------------------
def rb_forward(p, x):
    h = conv1x1(x, p['conv1'], bnrelu=True)
    h = conv3x3_bnrelu(h, p['conv2'])
    # Residual add fused into the last 1x1 kernel.  Dropout2d(0.25): eval identity.
    return conv1x1(h, p['conv3'], bnrelu=True, residual=x)


def frru_forward(p, y, cy, z, scale):
    zp = maxpool(z, scale)
    x = jnp.concatenate([y, zp], axis=-1)
    segs = [(cy, y.shape[-1]), (32, zp.shape[-1])]
    yp = conv3x3_bnrelu(x, p['conv1'], segs=segs)
    yp = conv3x3_bnrelu(yp, p['conv2'])
    r = conv1x1(yp, p['conv_res'], bnrelu=False)
    # TODO(synk): this residual lives at z-resolution (after nearest upsample), so it is
    # not fused into the conv_res kernel.
    z_new = z + nearest_up(r, scale)
    return yp, z_new


def frrn_forward(params, x_nchw):
    x = jnp.transpose(x_nchw, (0, 2, 3, 1)).astype(jnp.float32)       # NCHW -> NHWC
    x = jnp.pad(x, ((0, 0), (0, 0), (0, 0),
                    (0, _rup(x.shape[-1]) - x.shape[-1])))            # lane-dense channels

    x = conv3x3_bnrelu(x, params['conv1'])                            # real 32 / padded 128
    for i in range(2):
        x = rb_forward(params['up_rb'][i], x)

    y, z = x, x
    prev = 32
    for si, (n_blocks, ch, scale) in enumerate(ENCODER_SPECS):
        y_pooled = maxpool(y, 2)
        for b in range(n_blocks):
            y, z = frru_forward(params['enc'][si][b], y_pooled, prev, z, scale)
        prev = ch

    for si, (n_blocks, ch, scale) in enumerate(DECODER_SPECS):
        y_up = bilinear_ac(y, 2 * y.shape[1], 2 * y.shape[2])
        for b in range(n_blocks):
            y, z = frru_forward(params['dec'][si][b], y_up, prev, z, scale)
        prev = ch

    y_up = bilinear_ac(y, 2 * y.shape[1], 2 * y.shape[2])
    x = jnp.concatenate([y_up, z], axis=-1)
    segs = [(prev, y_up.shape[-1]), (32, z.shape[-1])]
    x = conv1x1(x, params['merge'], segs=segs, bnrelu=False)
    for i in range(2):
        x = rb_forward(params['down_rb'][i], x)
    x = conv1x1(x, params['classif'], bnrelu=False)
    x = x[..., :N_CLASSES]                                            # drop zero lanes
    return jnp.transpose(x, (0, 3, 1, 2))                             # -> NCHW


# ----------------------------------------------------------------------------
# Pure-JAX / XLA reference (real channel widths) for on-device validation
# ----------------------------------------------------------------------------
def _bn_relu_ref(x, p):
    c = x.shape[-1]
    s, t = _fold_bn(p, [(c, c)])
    return jnp.maximum(x * s + t, 0.0)


def conv3x3_bnrelu_ref(x, p):
    a = _bn_relu_ref(x, p).astype(jnp.bfloat16)
    w = p['w'].astype(jnp.bfloat16)
    y = jax.lax.conv_general_dilated(
        a, w, window_strides=(1, 1), padding=((1, 1), (1, 1)),
        dimension_numbers=('NHWC', 'HWIO', 'NHWC'),
        preferred_element_type=jnp.float32)
    return y + p['b'][0]


def conv1x1_ref(x, p, *, bnrelu=True):
    a = _bn_relu_ref(x, p) if bnrelu else x
    y = jnp.einsum('nhwc,cd->nhwd', a.astype(jnp.bfloat16),
                   p['w'].astype(jnp.bfloat16),
                   preferred_element_type=jnp.float32)
    return y + p['b'][0]


def rb_forward_ref(p, x):
    h = conv1x1_ref(x, p['conv1'])
    h = conv3x3_bnrelu_ref(h, p['conv2'])
    h = conv1x1_ref(h, p['conv3'])
    return h + x


def frru_forward_ref(p, y, z, scale):
    zp = maxpool(z, scale)
    x = jnp.concatenate([y, zp], axis=-1)
    yp = conv3x3_bnrelu_ref(x, p['conv1'])
    yp = conv3x3_bnrelu_ref(yp, p['conv2'])
    r = conv1x1_ref(yp, p['conv_res'], bnrelu=False)
    return yp, z + nearest_up(r, scale)


def frrn_forward_ref(params, x_nchw):
    x = jnp.transpose(x_nchw, (0, 2, 3, 1)).astype(jnp.float32)
    x = conv3x3_bnrelu_ref(x, params['conv1'])
    for i in range(2):
        x = rb_forward_ref(params['up_rb'][i], x)
    y = z = x
    for si, (n_blocks, ch, scale) in enumerate(ENCODER_SPECS):
        y_pooled = maxpool(y, 2)
        for b in range(n_blocks):
            y, z = frru_forward_ref(params['enc'][si][b], y_pooled, z, scale)
    for si, (n_blocks, ch, scale) in enumerate(DECODER_SPECS):
        y_up = bilinear_ac(y, 2 * y.shape[1], 2 * y.shape[2])
        for b in range(n_blocks):
            y, z = frru_forward_ref(params['dec'][si][b], y_up, z, scale)
    y_up = bilinear_ac(y, 2 * y.shape[1], 2 * y.shape[2])
    x = jnp.concatenate([y_up, z], axis=-1)
    x = conv1x1_ref(x, params['merge'], bnrelu=False)
    for i in range(2):
        x = rb_forward_ref(params['down_rb'][i], x)
    x = conv1x1_ref(x, params['classif'], bnrelu=False)
    return jnp.transpose(x, (0, 3, 1, 2))


# ----------------------------------------------------------------------------
# Deterministic parameter init (synthetic; shapes match the PyTorch module)
# ----------------------------------------------------------------------------
def _init_bn(key, c):
    k1, k2, k3, k4 = jax.random.split(key, 4)
    return dict(
        gamma=(1.0 + 0.1 * jax.random.normal(k1, (1, c))).astype(jnp.float32),
        beta=(0.1 * jax.random.normal(k2, (1, c))).astype(jnp.float32),
        mean=(0.1 * jax.random.normal(k3, (1, c))).astype(jnp.float32),
        var=(1.0 + 0.1 * jnp.abs(jax.random.normal(k4, (1, c)))).astype(jnp.float32),
    )


def _init_cbr(key, cin, cout, k):
    kb, kw, kbias = jax.random.split(key, 3)
    p = _init_bn(kb, cin)
    std = 1.0 / math.sqrt(cin * k * k)
    if k == 3:
        p['w'] = (std * jax.random.normal(kw, (3, 3, cin, cout))).astype(jnp.float32)
    else:
        p['w'] = (std * jax.random.normal(kw, (cin, cout))).astype(jnp.float32)
    p['b'] = (std * jax.random.normal(kbias, (1, cout))).astype(jnp.float32)
    return p


def _init_conv1x1(key, cin, cout):
    kw, kb = jax.random.split(key)
    std = 1.0 / math.sqrt(cin)
    return dict(
        w=(std * jax.random.normal(kw, (cin, cout))).astype(jnp.float32),
        b=(std * jax.random.normal(kb, (1, cout))).astype(jnp.float32),
    )


def init_params(key):
    ks = iter(jax.random.split(key, 64))
    P = {}
    P['conv1'] = _init_cbr(next(ks), 1, 32, 3)
    P['up_rb'] = [dict(conv1=_init_cbr(next(ks), 32, 32, 1),
                       conv2=_init_cbr(next(ks), 32, 32, 3),
                       conv3=_init_cbr(next(ks), 32, 32, 1)) for _ in range(2)]
    P['down_rb'] = [dict(conv1=_init_cbr(next(ks), 32, 32, 1),
                         conv2=_init_cbr(next(ks), 32, 32, 3),
                         conv3=_init_cbr(next(ks), 32, 32, 1)) for _ in range(2)]
    prev = 32
    P['enc'] = []
    for n_blocks, ch, scale in ENCODER_SPECS:
        blocks = []
        for _ in range(n_blocks):
            blocks.append(dict(
                conv1=_init_cbr(next(ks), prev + 32, ch, 3),
                conv2=_init_cbr(next(ks), ch, ch, 3),
                conv_res=_init_conv1x1(next(ks), ch, 32)))
        prev = ch
        P['enc'].append(blocks)
    P['dec'] = []
    for n_blocks, ch, scale in DECODER_SPECS:
        blocks = []
        for _ in range(n_blocks):
            blocks.append(dict(
                conv1=_init_cbr(next(ks), prev + 32, ch, 3),
                conv2=_init_cbr(next(ks), ch, ch, 3),
                conv_res=_init_conv1x1(next(ks), ch, 32)))
        prev = ch
        P['dec'].append(blocks)
    P['merge'] = _init_conv1x1(next(ks), prev + 32, 32)
    P['classif'] = _init_conv1x1(next(ks), 32, N_CLASSES)
    return P


# ----------------------------------------------------------------------------
if __name__ == "__main__":
    key = jax.random.PRNGKey(0)
    kx, kp, k1, k2, k3 = jax.random.split(key, 5)

    # --- standalone kernel checks that explicitly exercise multi-step grids ---
    p3 = _init_cbr(k1, 32, 48, 3)
    xs = jax.random.normal(k2, (2, 16, 16, 32), jnp.float32)
    xs_pad = jnp.pad(xs, ((0, 0), (0, 0), (0, 0), (0, LANE - 32)))
    got3 = conv3x3_bnrelu(xs_pad, p3, row_tile=4)[..., :48]       # 4 row tiles x 2 batches
    ref3 = conv3x3_bnrelu_ref(xs, p3)
    assert jnp.allclose(got3, ref3, atol=1e-2, rtol=1e-2)

    p1 = _init_cbr(k3, 32, 32, 1)
    got1 = conv1x1(xs_pad, p1, bnrelu=True, m_tile=64)[..., :32]  # 8 M-tiles
    ref1 = conv1x1_ref(xs, p1)
    assert jnp.allclose(got1, ref1, atol=1e-2, rtol=1e-2)

    # --- full FRRN forward: Pallas path vs plain-JAX/XLA reference ---
    x = jax.random.normal(kx, (2, 1, 16, 16), jnp.float32)        # NCHW, 1 input channel
    params = init_params(kp)

    out = jax.block_until_ready(jax.jit(frrn_forward)(params, x))
    ref = jax.block_until_ready(jax.jit(frrn_forward_ref)(params, x))

    assert out.shape == (2, N_CLASSES, 16, 16), out.shape
    assert bool(jnp.all(jnp.isfinite(out)))
    assert jnp.allclose(out, ref, atol=1e-2, rtol=1e-2), float(jnp.max(jnp.abs(out - ref)))
    print("KERNEL_OK")
</pallas_src>

<mosaic_0001>
module attributes {stable_mosaic.version = 11 : i64} {
  func.func @_conv3x3_kernel(%arg0: i32, %arg1: i32, %arg2: memref<1x128xf32, #tpu.memory_space<vmem>>, %arg3: memref<1x128xf32, #tpu.memory_space<vmem>>, %arg4: memref<3x384x128xbf16, #tpu.memory_space<vmem>>, %arg5: memref<1x128xf32, #tpu.memory_space<vmem>>, %arg6: memref<1x4x18x128xf32, #tpu.memory_space<vmem>>, %arg7: memref<1x1x18x128xf32, #tpu.memory_space<vmem>>, %arg8: memref<1x1x18x128xf32, #tpu.memory_space<vmem>>, %arg9: memref<1x4x16x128xf32, #tpu.memory_space<vmem>>) attributes {dimension_semantics = [#tpu.dimension_semantics<parallel>, #tpu.dimension_semantics<parallel>], iteration_bounds = array<i64: 2, 4>, scalar_prefetch = 0 : i64, scratch_operands = 0 : i64, tpu.core_type = #tpu.core_type<tc>, window_params = [{pipeline_mode = #tpu.pipeline_mode<synchronous>, transform_indices = @transform_0, window_bounds = array<i64: 1, 128>}, {pipeline_mode = #tpu.pipeline_mode<synchronous>, transform_indices = @transform_1, window_bounds = array<i64: 1, 128>}, {pipeline_mode = #tpu.pipeline_mode<synchronous>, transform_indices = @transform_2, window_bounds = array<i64: 3, 384, 128>}, {pipeline_mode = #tpu.pipeline_mode<synchronous>, transform_indices = @transform_3, window_bounds = array<i64: 1, 128>}, {transform_indices = @transform_4, window_bounds = array<i64: 1, 4, 18, 128>}, {transform_indices = @transform_5, window_bounds = array<i64: 1, 1, 18, 128>}, {transform_indices = @transform_6, window_bounds = array<i64: 1, 1, 18, 128>}, {transform_indices = @transform_7, window_bounds = array<i64: 1, 4, 16, 128>}]} {
    %c0 = arith.constant 0 : index
    %c0_0 = arith.constant 0 : index
    %c0_1 = arith.constant 0 : index
    %c0_2 = arith.constant 0 : index
    %0 = vector.load %arg6[%c0, %c0_0, %c0_1, %c0_2] : memref<1x4x18x128xf32, #tpu.memory_space<vmem>>, vector<1x4x18x128xf32>
    %1 = vector.shape_cast %0 : vector<1x4x18x128xf32> to vector<4x18x128xf32>
    %c0_3 = arith.constant 0 : index
    %c0_4 = arith.constant 0 : index
    %c0_5 = arith.constant 0 : index
    %c0_6 = arith.constant 0 : index
    %2 = vector.load %arg7[%c0_3, %c0_4, %c0_5, %c0_6] : memref<1x1x18x128xf32, #tpu.memory_space<vmem>>, vector<1x1x18x128xf32>
    %3 = vector.shape_cast %2 : vector<1x1x18x128xf32> to vector<1x18x128xf32>
    %c0_7 = arith.constant 0 : index
    %c0_8 = arith.constant 0 : index
    %c0_9 = arith.constant 0 : index
    %c0_10 = arith.constant 0 : index
    %4 = vector.load %arg8[%c0_7, %c0_8, %c0_9, %c0_10] : memref<1x1x18x128xf32, #tpu.memory_space<vmem>>, vector<1x1x18x128xf32>
    %5 = vector.shape_cast %4 : vector<1x1x18x128xf32> to vector<1x18x128xf32>
    %6 = tpu.concatenate %1, %3, %5 in 0 : vector<4x18x128xf32>, vector<1x18x128xf32>, vector<1x18x128xf32> -> vector<6x18x128xf32>
    %c0_11 = arith.constant 0 : index
    %c0_12 = arith.constant 0 : index
    %7 = vector.load %arg2[%c0_11, %c0_12] : memref<1x128xf32, #tpu.memory_space<vmem>>, vector<1x128xf32>
    %8 = vector.shape_cast %7 : vector<1x128xf32> to vector<1x1x128xf32>
    %9 = vector.broadcast %8 : vector<1x1x128xf32> to vector<6x18x128xf32>
    %10 = arith.mulf %6, %9 : vector<6x18x128xf32>
    %c0_13 = arith.constant 0 : index
    %c0_14 = arith.constant 0 : index
    %11 = vector.load %arg3[%c0_13, %c0_14] : memref<1x128xf32, #tpu.memory_space<vmem>>, vector<1x128xf32>
    %12 = vector.shape_cast %11 : vector<1x128xf32> to vector<1x1x128xf32>
    %13 = vector.broadcast %12 : vector<1x1x128xf32> to vector<6x18x128xf32>
    %14 = arith.addf %10, %13 : vector<6x18x128xf32>
    %cst = arith.constant 0.000000e+00 : f32
    %15 = vector.broadcast %cst : f32 to vector<6x18x128xf32>
    %16 = arith.maximumf %14, %15 : vector<6x18x128xf32>
    %17 = tpu.iota {dimensions = array<i32: 0>} : vector<6x1x1xi32>
    %c4_i32 = arith.constant 4 : i32
    %18 = arith.muli %arg1, %c4_i32 : i32
    %19 = vector.broadcast %18 : i32 to vector<6x1x1xi32>
    %20 = arith.addi %17, %19 : vector<6x1x1xi32>
    %21 = tpu.iota {dimensions = array<i32: 1>} : vector<1x18x1xi32>
    %c1_i32 = arith.constant 1 : i32
    %22 = vector.broadcast %c1_i32 : i32 to vector<6x1x1xi32>
    %23 = arith.cmpi sge, %20, %22 : vector<6x1x1xi32>
    %c16_i32 = arith.constant 16 : i32
    %24 = vector.broadcast %c16_i32 : i32 to vector<6x1x1xi32>
    %25 = arith.cmpi sle, %20, %24 : vector<6x1x1xi32>
    %26 = arith.andi %23, %25 : vector<6x1x1xi1>
    %c1_i32_15 = arith.constant 1 : i32
    %27 = vector.broadcast %c1_i32_15 : i32 to vector<1x18x1xi32>
    %28 = arith.cmpi sge, %21, %27 : vector<1x18x1xi32>
    %29 = vector.broadcast %26 : vector<6x1x1xi1> to vector<6x18x1xi1>
    %30 = vector.broadcast %28 : vector<1x18x1xi1> to vector<6x18x1xi1>
    %31 = arith.andi %29, %30 : vector<6x18x1xi1>
    %c16_i32_16 = arith.constant 16 : i32
    %32 = vector.broadcast %c16_i32_16 : i32 to vector<1x18x1xi32>
    %33 = arith.cmpi sle, %21, %32 : vector<1x18x1xi32>
    %34 = vector.broadcast %33 : vector<1x18x1xi1> to vector<6x18x1xi1>
    %35 = arith.andi %31, %34 : vector<6x18x1xi1>
    %cst_17 = arith.constant 0.000000e+00 : f32
    %36 = vector.shape_cast %35 : vector<6x18x1xi1> to vector<6x18x1xi1>
    %37 = vector.broadcast %36 : vector<6x18x1xi1> to vector<6x18x128xi1>
    %38 = vector.broadcast %cst_17 : f32 to vector<6x18x128xf32>
    %39 = arith.select %37, %16, %38 : vector<6x18x128xi1>, vector<6x18x128xf32>
    %40 = arith.truncf %39 : vector<6x18x128xf32> to vector<6x18x128xbf16>
    %41 = vector.extract_strided_slice %40 {offsets = [0, 0, 0], sizes = [6, 16, 128], strides = [1, 1, 1]} : vector<6x18x128xbf16> to vector<6x16x128xbf16>
    %42 = vector.extract_strided_slice %40 {offsets = [0, 1, 0], sizes = [6, 16, 128], strides = [1, 1, 1]} : vector<6x18x128xbf16> to vector<6x16x128xbf16>
    %43 = vector.extract_strided_slice %40 {offsets = [0, 2, 0], sizes = [6, 16, 128], strides = [1, 1, 1]} : vector<6x18x128xbf16> to vector<6x16x128xbf16>
    %44 = tpu.concatenate %41, %42, %43 in 2 : vector<6x16x128xbf16>, vector<6x16x128xbf16>, vector<6x16x128xbf16> -> vector<6x16x384xbf16>
    %cst_18 = arith.constant 0.000000e+00 : f32
    %45 = vector.broadcast %cst_18 : f32 to vector<64x128xf32>
    %46 = vector.extract_strided_slice %44 {offsets = [0, 0, 0], sizes = [4, 16, 384], strides = [1, 1, 1]} : vector<6x16x384xbf16> to vector<4x16x384xbf16>
    %47 = vector.shape_cast %46 : vector<4x16x384xbf16> to vector<64x384xbf16>
    %c0_19 = arith.constant 0 : index
    %c0_20 = arith.constant 0 : index
    %c0_21 = arith.constant 0 : index
    %48 = vector.load %arg4[%c0_19, %c0_20, %c0_21] : memref<3x384x128xbf16, #tpu.memory_space<vmem>>, vector<1x384x128xbf16>
    %49 = vector.shape_cast %48 : vector<1x384x128xbf16> to vector<384x128xbf16>
    %cst_22 = arith.constant dense<0.000000e+00> : vector<64x128xf32>
    %50 = tpu.matmul %47, %49, %cst_22 {dimension_numbers = #tpu.dot_dimension_numbers<[1], [0], [0], [1], [0, 0, 1, 1], [], []>} : vector<64x384xbf16>, vector<384x128xbf16>, vector<64x128xf32> -> vector<64x128xf32>
    %51 = arith.addf %45, %50 : vector<64x128xf32>
    %52 = vector.extract_strided_slice %44 {offsets = [1, 0, 0], sizes = [4, 16, 384], strides = [1, 1, 1]} : vector<6x16x384xbf16> to vector<4x16x384xbf16>
    %53 = vector.shape_cast %52 : vector<4x16x384xbf16> to vector<64x384xbf16>
    %c1 = arith.constant 1 : index
    %c0_23 = arith.constant 0 : index
    %c0_24 = arith.constant 0 : index
    %54 = vector.load %arg4[%c1, %c0_23, %c0_24] : memref<3x384x128xbf16, #tpu.memory_space<vmem>>, vector<1x384x128xbf16>
    %55 = vector.shape_cast %54 : vector<1x384x128xbf16> to vector<384x128xbf16>
    %cst_25 = arith.constant dense<0.000000e+00> : vector<64x128xf32>
    %56 = tpu.matmul %53, %55, %cst_25 {dimension_numbers = #tpu.dot_dimension_numbers<[1], [0], [0], [1], [0, 0, 1, 1], [], []>} : vector<64x384xbf16>, vector<384x128xbf16>, vector<64x128xf32> -> vector<64x128xf32>
    %57 = arith.addf %51, %56 : vector<64x128xf32>
    %58 = vector.extract_strided_slice %44 {offsets = [2, 0, 0], sizes = [4, 16, 384], strides = [1, 1, 1]} : vector<6x16x384xbf16> to vector<4x16x384xbf16>
    %59 = vector.shape_cast %58 : vector<4x16x384xbf16> to vector<64x384xbf16>
    %c2 = arith.constant 2 : index
    %c0_26 = arith.constant 0 : index
    %c0_27 = arith.constant 0 : index
    %60 = vector.load %arg4[%c2, %c0_26, %c0_27] : memref<3x384x128xbf16, #tpu.memory_space<vmem>>, vector<1x384x128xbf16>
    %61 = vector.shape_cast %60 : vector<1x384x128xbf16> to vector<384x128xbf16>
    %cst_28 = arith.constant dense<0.000000e+00> : vector<64x128xf32>
    %62 = tpu.matmul %59, %61, %cst_28 {dimension_numbers = #tpu.dot_dimension_numbers<[1], [0], [0], [1], [0, 0, 1, 1], [], []>} : vector<64x384xbf16>, vector<384x128xbf16>, vector<64x128xf32> -> vector<64x128xf32>
    %63 = arith.addf %57, %62 : vector<64x128xf32>
    %c0_29 = arith.constant 0 : index
    %c0_30 = arith.constant 0 : index
    %64 = vector.load %arg5[%c0_29, %c0_30] : memref<1x128xf32, #tpu.memory_space<vmem>>, vector<1x128xf32>
    %65 = vector.broadcast %64 : vector<1x128xf32> to vector<64x128xf32>
    %66 = arith.addf %63, %65 : vector<64x128xf32>
    %67 = vector.shape_cast %66 : vector<64x128xf32> to vector<4x16x128xf32>
    %c0_31 = arith.constant 0 : index
    %c0_32 = arith.constant 0 : index
    %c0_33 = arith.constant 0 : index
    %c0_34 = arith.constant 0 : index
    %68 = vector.load %arg9[%c0_31, %c0_32, %c0_33, %c0_34] : memref<1x4x16x128xf32, #tpu.memory_space<vmem>>, vector<1x4x16x128xf32>
    %69 = vector.shape_cast %68 : vector<1x4x16x128xf32> to vector<4x16x128xf32>
    %70 = vector.shape_cast %67 : vector<4x16x128xf32> to vector<1x4x16x128xf32>
    tpu.vector_store %arg9[%c0_31, %c0_32, %c0_33, %c0_34], %70 {strides = array<i32>} : memref<1x4x16x128xf32, #tpu.memory_space<vmem>>, vector<1x4x16x128xf32>,
    return
  }
  func.func @transform_0(%arg0: i32, %arg1: i32) -> (i32, i32) {
    %c0_i32 = arith.constant 0 : i32
    %c0_i32_0 = arith.constant 0 : i32
    %c0_i32_1 = arith.constant 0 : i32
    return %c0_i32, %c0_i32_0 : i32, i32
  }
  func.func @transform_1(%arg0: i32, %arg1: i32) -> (i32, i32) {
    %c0_i32 = arith.constant 0 : i32
    %c0_i32_0 = arith.constant 0 : i32
    %c0_i32_1 = arith.constant 0 : i32
    return %c0_i32, %c0_i32_0 : i32, i32
  }
  func.func @transform_2(%arg0: i32, %arg1: i32) -> (i32, i32, i32) {
    %c0_i32 = arith.constant 0 : i32
    %c0_i32_0 = arith.constant 0 : i32
    %c0_i32_1 = arith.constant 0 : i32
    %c0_i32_2 = arith.constant 0 : i32
    return %c0_i32, %c0_i32_0, %c0_i32_1 : i32, i32, i32
  }
  func.func @transform_3(%arg0: i32, %arg1: i32) -> (i32, i32) {
    %c0_i32 = arith.constant 0 : i32
    %c0_i32_0 = arith.constant 0 : i32
    %c0_i32_1 = arith.constant 0 : i32
    return %c0_i32, %c0_i32_0 : i32, i32
  }
  func.func @transform_4(%arg0: i32, %arg1: i32) -> (i32, i32, i32, i32) {
    %c0_i32 = arith.constant 0 : i32
    %c0_i32_0 = arith.constant 0 : i32
    %c0_i32_1 = arith.constant 0 : i32
    return %arg0, %arg1, %c0_i32, %c0_i32_0 : i32, i32, i32, i32
  }
  func.func @transform_5(%arg0: i32, %arg1: i32) -> (i32, i32, i32, i32) {
    %c4_i32 = arith.constant 4 : i32
    %0 = arith.muli %arg1, %c4_i32 : i32
    %c4_i32_0 = arith.constant 4 : i32
    %1 = arith.addi %0, %c4_i32_0 : i32
    %c0_i32 = arith.constant 0 : i32
    %c0_i32_1 = arith.constant 0 : i32
    %c0_i32_2 = arith.constant 0 : i32
    return %arg0, %1, %c0_i32, %c0_i32_1 : i32, i32, i32, i32
  }
  func.func @transform_6(%arg0: i32, %arg1: i32) -> (i32, i32, i32, i32) {
    %c4_i32 = arith.constant 4 : i32
    %0 = arith.muli %arg1, %c4_i32 : i32
    %c4_i32_0 = arith.constant 4 : i32
    %1 = arith.addi %0, %c4_i32_0 : i32
    %c1_i32 = arith.constant 1 : i32
    %2 = arith.addi %1, %c1_i32 : i32
    %c0_i32 = arith.constant 0 : i32
    %c0_i32_1 = arith.constant 0 : i32
    %c0_i32_2 = arith.constant 0 : i32
    return %arg0, %2, %c0_i32, %c0_i32_1 : i32, i32, i32, i32
  }
  func.func @transform_7(%arg0: i32, %arg1: i32) -> (i32, i32, i32, i32) {
    %c0_i32 = arith.constant 0 : i32
    %c0_i32_0 = arith.constant 0 : i32
    %c0_i32_1 = arith.constant 0 : i32
    return %arg0, %arg1, %c0_i32, %c0_i32_0 : i32, i32, i32, i32
  }
}

</mosaic_0001>

<llo_original>
// kernel: tpu_custom_call.1
$region0: #{tpu_custom_call.1}
  #allocation0 [shape = 'u32[]', space=smem, size = 0x4, offset = 0x4, fixed_abs, tag = 'smem constant byte address 0x4 - core index']
  #allocation1 [shape = 'u32[144,128]{1,0:T(1,128)}', space=vmem, size = 0x12000, scoped, tag = 'internal scratch']
  %s0 = inlined_call_operand.vmem [shape: f32[1,128], index: 0, kind: input, shape index: {}]
  %s1 = inlined_call_operand.vmem [shape: f32[1,128], index: 1, kind: input, shape index: {}]
  %s2 = inlined_call_operand.vmem [shape: bf16[3,384,128], index: 2, kind: input, shape index: {}]
  %s3 = inlined_call_operand.vmem [shape: f32[1,128], index: 3, kind: input, shape index: {}]
  %s4 = inlined_call_operand.vmem [shape: f32[2,18,18,128], index: 4, kind: input, shape index: {}]
  %s5 = inlined_call_operand.vmem [shape: f32[2,18,18,128], index: 5, kind: input, shape index: {}]
  %s6 = inlined_call_operand.vmem [shape: f32[2,18,18,128], index: 6, kind: input, shape index: {}]
  %s7 = inlined_call_operand.hbm [shape: f32[2,16,16,128], index: 7, kind: output, shape index: {}]
  %s8 = sld [smem:[#allocation0]]
  $region61: #{tpu_custom_call.1} parent=0
    _
  %s10 = ssub.s32 1, %s8
  %s11 = scalar_select 0, %s10, %s8
  $region1: #{tpu_custom_call.1} parent=0
    #allocation2 [shape = 'u8[65536]{0}', space=vmem, size = 0x10000, scoped, tag = 'output window, operand 0']
    #allocation3 [shape = 's32[2]{0}', space=sflag, size = 0x8, scoped, tag = 'scoped memory for tpu_custom_call.1']
    %12 = vsyncpa [#allocation3], 0
    %s13 = scalar_lea.sflag [#allocation3], 1
    %14 = vsyncpa %s13, 0
    loop: start=0, step=1, limit=10
    $region2: #{tpu_custom_call.1} parent=1 // loop_pre_header
      _
    $region3: #{tpu_custom_call.1} parent=1 // loop_header
      %s16 = sphi 0, %s20
      %p17 = scmp.ge.s32.totalorder %s16, 10
      %s23 = sphi 0, %s35
      %s24 = sphi 0, %s31
      %s25 = sphi 0, %s23
      %s26 = sphi 0, %s24
      %s27 = sphi 0, %s25
      %s28 = sphi 0, %s26
      %s36 = sphi 0, %s36
      %s38 = sphi 0, %s36
      %s39 = sphi 0, %s38
      %s53 = sphi 0, %s39
      %s57 = sphi 0, %s57
      %s59 = sphi 0, %s57
      %s60 = sphi 0, %s59
      %s74 = sphi 0, %s60
      %s78 = sphi 0, %s78
      %s80 = sphi 0, %s78
      %s81 = sphi 0, %s80
      %s95 = sphi 0, %s81
      %s99 = sphi 0, %s99
      %s101 = sphi 0, %s99
      %s102 = sphi 0, %s101
      %s116 = sphi 0, %s102
      %s124 = sphi 0, %s126
      %s127 = sphi 0, %s124
      %s128 = sphi 0, %s127
      %s144 = sphi 0, %s128
      %s156 = sphi 0, %s158
      %s159 = sphi 0, %s156
      %s160 = sphi 0, %s159
      %s176 = sphi 0, %s160
      %s188 = sphi 0, %s190
      %s191 = sphi 0, %s188
      %s192 = sphi 0, %s191
      %s208 = sphi 0, %s192
      %s216 = sphi 0, %s218
      %s219 = sphi 0, %s216
      %s220 = sphi 0, %s219
      %s236 = sphi 0, %s220
    $region4: #{tpu_custom_call.1} parent=1 // loop_header_branch
      %19 = sbr.rel (%p17) target = $region8
    $region5: #{tpu_custom_call.1} parent=1 // loop_body
      %s21 = ssub.s32 %s16, 1
      %s22 = ssub.s32 %s16, 2
      %s29 = sadd.s32 1, %s24
      %p30 = scmp.ge.s32.totalorder %s29, 4
      %s31 = scalar_select %p30, 0, %s29
      %s32 = sadd.s32 1, %s23
      %s33 = scalar_select %p30, %s32, %s23
      %p34 = scmp.ge.s32.totalorder %s33, 2
      %s35 = scalar_select %p34, 0, %s33
      %s37 = sadd.s32 %s36, 1
      %p40 = scmp.eq.s32.totalorder %s16, 7
      %p41 = scmp.ne.s32.totalorder %s36, %s38
      %p42 = scmp.eq.s32.totalorder %s16, 0
      %p43 = por %p41, %p42
      %p44 = scmp.ne.s32.totalorder %s36, %s38
      %p45 = scmp.eq.s32.totalorder %s21, 7
      %p46 = por %p44, %p45
      %p47 = scmp.ne.s32.totalorder %s38, %s39
      %p48 = scmp.eq.s32.totalorder %s21, 0
      %p49 = por %p47, %p48
      %p50 = scmp.ne.s32.totalorder %s38, %s39
      %p51 = scmp.eq.s32.totalorder %s22, 7
      %p52 = por %p50, %p51
      %p54 = scmp.ne.s32.totalorder %s39, %s53
      %p55 = scmp.eq.s32.totalorder %s22, 0
      %p56 = por %p54, %p55
      %s58 = sadd.s32 %s57, 1
      %p61 = scmp.eq.s32.totalorder %s16, 7
      %p62 = scmp.ne.s32.totalorder %s57, %s59
      %p63 = scmp.eq.s32.totalorder %s16, 0
      %p64 = por %p62, %p63
      %p65 = scmp.ne.s32.totalorder %s57, %s59
      %p66 = scmp.eq.s32.totalorder %s21, 7
      %p67 = por %p65, %p66
      %p68 = scmp.ne.s32.totalorder %s59, %s60
      %p69 = scmp.eq.s32.totalorder %s21, 0
      %p70 = por %p68, %p69
      %p71 = scmp.ne.s32.totalorder %s59, %s60
      %p72 = scmp.eq.s32.totalorder %s22, 7
      %p73 = por %p71, %p72
      %p75 = scmp.ne.s32.totalorder %s60, %s74
      %p76 = scmp.eq.s32.totalorder %s22, 0
      %p77 = por %p75, %p76
      %s79 = sadd.s32 %s78, 1
      %p82 = scmp.eq.s32.totalorder %s16, 7
      %p83 = scmp.ne.s32.totalorder %s78, %s80
      %p84 = scmp.eq.s32.totalorder %s16, 0
      %p85 = por %p83, %p84
      %p86 = scmp.ne.s32.totalorder %s78, %s80
      %p87 = scmp.eq.s32.totalorder %s21, 7
      %p88 = por %p86, %p87
      %p89 = scmp.ne.s32.totalorder %s80, %s81
      %p90 = scmp.eq.s32.totalorder %s21, 0
      %p91 = por %p89, %p90
      %p92 = scmp.ne.s32.totalorder %s80, %s81
      %p93 = scmp.eq.s32.totalorder %s22, 7
      %p94 = por %p92, %p93
      %p96 = scmp.ne.s32.totalorder %s81, %s95
      %p97 = scmp.eq.s32.totalorder %s22, 0
      %p98 = por %p96, %p97
      %s100 = sadd.s32 %s99, 1
      %p103 = scmp.eq.s32.totalorder %s16, 7
      %p104 = scmp.ne.s32.totalorder %s99, %s101
      %p105 = scmp.eq.s32.totalorder %s16, 0
      %p106 = por %p104, %p105
      %p107 = scmp.ne.s32.totalorder %s99, %s101
      %p108 = scmp.eq.s32.totalorder %s21, 7
      %p109 = por %p107, %p108
      %p110 = scmp.ne.s32.totalorder %s101, %s102
      %p111 = scmp.eq.s32.totalorder %s21, 0
      %p112 = por %p110, %p111
      %p113 = scmp.ne.s32.totalorder %s101, %s102
      %p114 = scmp.eq.s32.totalorder %s22, 7
      %p115 = por %p113, %p114
      %p117 = scmp.ne.s32.totalorder %s102, %s116
      %p118 = scmp.eq.s32.totalorder %s22, 0
      %p119 = por %p117, %p118
      %s120 = ssub.s32 %s23, %s35
      %s121 = ssub.s32 %s24, %s31
      %s122 = sor.u32 %s120, %s121
      %p123 = scmp.eq.s32.totalorder %s122, 0
      %s125 = sadd.s32 %s124, 1
      %s126 = scalar_select %p123, %s124, %s125
      %p129 = pneg %p123
      %p130 = scmp.eq.s32.totalorder %s16, 7
      %p131 = por %p129, %p130
      %p132 = scmp.ne.s32.totalorder %s124, %s127
      %p133 = scmp.eq.s32.totalorder %s16, 0
      %p134 = por %p132, %p133
      %p135 = scmp.ne.s32.totalorder %s124, %s127
      %p136 = scmp.eq.s32.totalorder %s21, 7
      %p137 = por %p135, %p136
      %p138 = scmp.ne.s32.totalorder %s127, %s128
      %p139 = scmp.eq.s32.totalorder %s21, 0
      %p140 = por %p138, %p139
      %p141 = scmp.ne.s32.totalorder %s127, %s128
      %p142 = scmp.eq.s32.totalorder %s22, 7
      %p143 = por %p141, %p142
      %p145 = scmp.ne.s32.totalorder %s128, %s144
      %p146 = scmp.eq.s32.totalorder %s22, 0
      %p147 = por %p145, %p146
      %s148 = smul.u32 %s24, 4
      %s149 = sadd.s32 %s148, 4
      %s150 = smul.u32 %s31, 4
      %s151 = sadd.s32 %s150, 4
      %s152 = ssub.s32 %s23, %s35
      %s153 = ssub.s32 %s149, %s151
      %s154 = sor.u32 %s152, %s153
      %p155 = scmp.eq.s32.totalorder %s154, 0
      %s157 = sadd.s32 %s156, 1
      %s158 = scalar_select %p155, %s156, %s157
      %p161 = pneg %p155
      %p162 = scmp.eq.s32.totalorder %s16, 7
      %p163 = por %p161, %p162
      %p164 = scmp.ne.s32.totalorder %s156, %s159
      %p165 = scmp.eq.s32.totalorder %s16, 0
      %p166 = por %p164, %p165
      %p167 = scmp.ne.s32.totalorder %s156, %s159
      %p168 = scmp.eq.s32.totalorder %s21, 7
      %p169 = por %p167, %p168
      %p170 = scmp.ne.s32.totalorder %s159, %s160
      %p171 = scmp.eq.s32.totalorder %s21, 0
      %p172 = por %p170, %p171
      %p173 = scmp.ne.s32.totalorder %s159, %s160
      %p174 = scmp.eq.s32.totalorder %s22, 7
      %p175 = por %p173, %p174
      %p177 = scmp.ne.s32.totalorder %s160, %s176
      %p178 = scmp.eq.s32.totalorder %s22, 0
      %p179 = por %p177, %p178
      %s180 = smul.u32 %s24, 4
      %s181 = sadd.s32 %s180, 5
      %s182 = smul.u32 %s31, 4
      %s183 = sadd.s32 %s182, 5
      %s184 = ssub.s32 %s23, %s35
      %s185 = ssub.s32 %s181, %s183
      %s186 = sor.u32 %s184, %s185
      %p187 = scmp.eq.s32.totalorder %s186, 0
      %s189 = sadd.s32 %s188, 1
      %s190 = scalar_select %p187, %s188, %s189
      %p193 = pneg %p187
      %p194 = scmp.eq.s32.totalorder %s16, 7
      %p195 = por %p193, %p194
      %p196 = scmp.ne.s32.totalorder %s188, %s191
      %p197 = scmp.eq.s32.totalorder %s16, 0
      %p198 = por %p196, %p197
      %p199 = scmp.ne.s32.totalorder %s188, %s191
      %p200 = scmp.eq.s32.totalorder %s21, 7
      %p201 = por %p199, %p200
      %p202 = scmp.ne.s32.totalorder %s191, %s192
      %p203 = scmp.eq.s32.totalorder %s21, 0
      %p204 = por %p202, %p203
      %p205 = scmp.ne.s32.totalorder %s191, %s192
      %p206 = scmp.eq.s32.totalorder %s22, 7
      %p207 = por %p205, %p206
      %p209 = scmp.ne.s32.totalorder %s192, %s208
      %p210 = scmp.eq.s32.totalorder %s22, 0
      %p211 = por %p209, %p210
      %s212 = ssub.s32 %s23, %s35
      %s213 = ssub.s32 %s24, %s31
      %s214 = sor.u32 %s212, %s213
      %p215 = scmp.eq.s32.totalorder %s214, 0
      %s217 = sadd.s32 %s216, 1
      %s218 = scalar_select %p215, %s216, %s217
      %p221 = pneg %p215
      %p222 = scmp.eq.s32.totalorder %s16, 7
      %p223 = por %p221, %p222
      %p224 = scmp.ne.s32.totalorder %s216, %s219
      %p225 = scmp.eq.s32.totalorder %s16, 0
      %p226 = por %p224, %p225
      %p227 = scmp.ne.s32.totalorder %s216, %s219
      %p228 = scmp.eq.s32.totalorder %s21, 7
      %p229 = por %p227, %p228
      %p230 = scmp.ne.s32.totalorder %s219, %s220
      %p231 = scmp.eq.s32.totalorder %s21, 0
      %p232 = por %p230, %p231
      %p233 = scmp.ne.s32.totalorder %s219, %s220
      %p234 = scmp.eq.s32.totalorder %s22, 7
      %p235 = por %p233, %p234
      %p237 = scmp.ne.s32.totalorder %s220, %s236
      %p238 = scmp.eq.s32.totalorder %s22, 0
      %p239 = por %p237, %p238
      %p240 = scmp.le.s32.totalorder 1, %s16
      %p241 = scmp.lt.s32.totalorder %s16, 9
      %p242 = pnand %p240, %p241
      %p243 = pneg %p242
      // Predicated region
      $region9: #{tpu_custom_call.1} parent=5 // pred_check
        _
      $region10: #{tpu_custom_call.1} parent=5 // pred_check_branch
        %245 = sbr.rel (%p242) target = $region12
      $region11: #{tpu_custom_call.1} parent=5 // pred_region
        %s246 = ssub.s32 %s16, 1
        // Predicated region
        $region13: #{tpu_custom_call.1} parent=11 // pred_check
          %p247 = pneg %p49
        $region14: #{tpu_custom_call.1} parent=11 // pred_check_branch
          %249 = sbr.rel (%p247) target = $region16
        $region15: #{tpu_custom_call.1} parent=11 // pred_region
          _
        $region16: #{tpu_custom_call.1} parent=11 // pred_fallthru
          _
        // Predicated region
        $region17: #{tpu_custom_call.1} parent=11 // pred_check
          %p250 = pneg %p70
        $region18: #{tpu_custom_call.1} parent=11 // pred_check_branch
          %252 = sbr.rel (%p250) target = $region20
        $region19: #{tpu_custom_call.1} parent=11 // pred_region
          _
        $region20: #{tpu_custom_call.1} parent=11 // pred_fallthru
          _
        // Predicated region
        $region21: #{tpu_custom_call.1} parent=11 // pred_check
          %p253 = pneg %p91
        $region22: #{tpu_custom_call.1} parent=11 // pred_check_branch
          %255 = sbr.rel (%p253) target = $region24
        $region23: #{tpu_custom_call.1} parent=11 // pred_region
          _
        $region24: #{tpu_custom_call.1} parent=11 // pred_fallthru
          _
        // Predicated region
        $region25: #{tpu_custom_call.1} parent=11 // pred_check
          %p256 = pneg %p112
        $region26: #{tpu_custom_call.1} parent=11 // pred_check_branch
          %258 = sbr.rel (%p256) target = $region28
        $region27: #{tpu_custom_call.1} parent=11 // pred_region
          _
        $region28: #{tpu_custom_call.1} parent=11 // pred_fallthru
          _
      $region12: #{tpu_custom_call.1} parent=5 // pred_fallthru
        _
      %p259 = scmp.lt.s32.totalorder %s16, 8
      // Predicated region
      $region29: #{tpu_custom_call.1} parent=5 // pred_check
        %p260 = pneg %p259
      $region30: #{tpu_custom_call.1} parent=5 // pred_check_branch
        %262 = sbr.rel (%p260) target = $region32
      $region31: #{tpu_custom_call.1} parent=5 // pred_region
        // Predicated region
        $region33: #{tpu_custom_call.1} parent=31 // pred_check
          %p263 = pneg %p134
        $region34: #{tpu_custom_call.1} parent=31 // pred_check_branch
          %265 = sbr.rel (%p263) target = $region36
        $region35: #{tpu_custom_call.1} parent=31 // pred_region
          %s266 = smul.u32 4, %s24
          %s267 = ssub.s32 18, %s266
          %p268 = scmp.lt.s32.totalorder %s267, 4
          %s269 = scalar_select %p268, %s267, 4
          %s270 = smul.u32 128, %s269
          %s271 = smul.u32 %s270, 3
          %p272 = scmp.lt.s32.totalorder %s23, 1
          %s273 = scalar_select %p272, %s23, 1
          %p274 = scmp.lt.s32.totalorder %s266, 17
          %s275 = scalar_select %p274, %s266, 17
          %s276 = smul.addr %s275, 3
          %s277 = smul.addr %s273, 54
          %s278 = sadd.s32 %s276, %s277
          %s279 = smul.addr %s278, 8
          %s280 = scalar_lea.vmem %s4, %s279
          %s281 = smul.u32 4, %s24
          %s282 = ssub.s32 18, %s281
          %p283 = scmp.lt.s32.totalorder %s282, 4
          %s284 = scalar_select %p283, %s282, 4
          %s285 = smul.u32 128, %s284
          %s286 = smul.u32 %s285, 3
        $region36: #{tpu_custom_call.1} parent=31 // pred_fallthru
          _
        // Predicated region
        $region37: #{tpu_custom_call.1} parent=31 // pred_check
          %p287 = pneg %p166
        $region38: #{tpu_custom_call.1} parent=31 // pred_check_branch
          %289 = sbr.rel (%p287) target = $region40
        $region39: #{tpu_custom_call.1} parent=31 // pred_region
          %s290 = smul.u32 %s24, 4
          %s291 = sadd.s32 %s290, 4
          %p292 = scmp.lt.s32.totalorder %s23, 1
          %s293 = scalar_select %p292, %s23, 1
          %p294 = scmp.lt.s32.totalorder %s291, 17
          %s295 = scalar_select %p294, %s291, 17
          %s296 = smul.addr %s295, 3
          %s297 = smul.addr %s293, 54
          %s298 = sadd.s32 %s296, %s297
          %s299 = smul.addr %s298, 8
          %s300 = scalar_lea.vmem %s5, %s299
          %s301 = smul.u32 %s24, 4
          %s302 = sadd.s32 %s301, 4
        $region40: #{tpu_custom_call.1} parent=31 // pred_fallthru
          _
        // Predicated region
        $region41: #{tpu_custom_call.1} parent=31 // pred_check
          %p303 = pneg %p198
        $region42: #{tpu_custom_call.1} parent=31 // pred_check_branch
          %305 = sbr.rel (%p303) target = $region44
        $region43: #{tpu_custom_call.1} parent=31 // pred_region
          %s306 = smul.u32 %s24, 4
          %s307 = sadd.s32 %s306, 5
          %p308 = scmp.lt.s32.totalorder %s23, 1
          %s309 = scalar_select %p308, %s23, 1
          %p310 = scmp.lt.s32.totalorder %s307, 17
          %s311 = scalar_select %p310, %s307, 17
          %s312 = smul.addr %s311, 3
          %s313 = smul.addr %s309, 54
          %s314 = sadd.s32 %s312, %s313
          %s315 = smul.addr %s314, 8
          %s316 = scalar_lea.vmem %s6, %s315
          %s317 = smul.u32 %s24, 4
          %s318 = sadd.s32 %s317, 5
        $region44: #{tpu_custom_call.1} parent=31 // pred_fallthru
          _
      $region32: #{tpu_custom_call.1} parent=5 // pred_fallthru
        _
      %p319 = scmp.le.s32.totalorder 1, %s16
      %p320 = scmp.lt.s32.totalorder %s16, 9
      %p321 = pnand %p319, %p320
      %p322 = pneg %p321
      // Predicated region
      $region45: #{tpu_custom_call.1} parent=5 // pred_check
        _
      $region46: #{tpu_custom_call.1} parent=5 // pred_check_branch
        %324 = sbr.rel (%p321) target = $region48
      $region47: #{tpu_custom_call.1} parent=5 // pred_region
        %s325 = ssub.s32 %s16, 1
        %p326 = pneg %p49
        %p327 = pneg %p46
        %p328 = pneg %p70
        %p329 = pneg %p67
        %p330 = pneg %p91
        %p331 = pneg %p88
        %p332 = pneg %p112
        %p333 = pneg %p109
        %s334 = smul.u32 4, %s26
        %s335 = ssub.s32 18, %s334
        %p336 = scmp.lt.s32.totalorder %s335, 4
        %s337 = scalar_select %p336, %s335, 4
        %s338 = smul.u32 128, %s337
        %s339 = smul.u32 %s338, 3
        %p340 = scmp.lt.s32.totalorder %s25, 1
        %s341 = scalar_select %p340, %s25, 1
        %p342 = scmp.lt.s32.totalorder %s334, 17
        %s343 = scalar_select %p342, %s334, 17
        %s344 = smul.addr %s343, 3
        %s345 = smul.addr %s341, 54
        %s346 = sadd.s32 %s344, %s345
        %s347 = smul.addr %s346, 8
        %s348 = scalar_lea.vmem %s4, %s347
        %p349 = pneg %p140
        %p350 = pneg %p137
        %s351 = smul.u32 %s26, 4
        %s352 = sadd.s32 %s351, 4
        %p353 = scmp.lt.s32.totalorder %s25, 1
        %s354 = scalar_select %p353, %s25, 1
        %p355 = scmp.lt.s32.totalorder %s352, 17
        %s356 = scalar_select %p355, %s352, 17
        %s357 = smul.addr %s356, 3
        %s358 = smul.addr %s354, 54
        %s359 = sadd.s32 %s357, %s358
        %s360 = smul.addr %s359, 8
        %s361 = scalar_lea.vmem %s5, %s360
        %p362 = pneg %p172
        %p363 = pneg %p169
        %s364 = smul.u32 %s26, 4
        %s365 = sadd.s32 %s364, 5
        %p366 = scmp.lt.s32.totalorder %s25, 1
        %s367 = scalar_select %p366, %s25, 1
        %p368 = scmp.lt.s32.totalorder %s365, 17
        %s369 = scalar_select %p368, %s365, 17
        %s370 = smul.addr %s369, 3
        %s371 = smul.addr %s367, 54
        %s372 = sadd.s32 %s370, %s371
        %s373 = smul.addr %s372, 8
        %s374 = scalar_lea.vmem %s6, %s373
        %p375 = pneg %p204
        %p376 = pneg %p201
        %p377 = pneg %p232
        %p378 = pneg %p229
        %s379 = sand.u32 %s219, 1
        %s380 = scalar_lea.sflag [#allocation3], %s379
        %s381 = sand.u32 %s219, 1
        %s382 = smul.addr %s381, 64
        %s383 = scalar_lea.vmem [#allocation2], %s382
        %s384 = smul.u32 4, %s26
        %s385 = ssub.s32 18, %s384
        %p386 = scmp.lt.s32.totalorder %s385, 4
        %s387 = scalar_select %p386, %s385, 4
        %s388 = smul.u32 128, %s387
        %s389 = smul.u32 %s388, 3
        %p390 = scmp.lt.s32.totalorder %s25, 1
        %s391 = scalar_select %p390, %s25, 1
        %p392 = scmp.lt.s32.totalorder %s384, 17
        %s393 = scalar_select %p392, %s384, 17
        %s394 = smul.addr %s393, 3
        %s395 = smul.addr %s391, 54
        %s396 = sadd.s32 %s394, %s395
        %s397 = smul.addr %s396, 8
        %s398 = scalar_lea.vmem %s4, %s397
        %s399 = smul.u32 4, %s26
        %s400 = ssub.s32 18, %s399
        %p401 = scmp.lt.s32.totalorder %s400, 4
        %s402 = scalar_select %p401, %s400, 4
        %s403 = smul.u32 128, %s402
        %s404 = smul.u32 %s403, 3
        %s405 = smul.u32 %s26, 4
        %s406 = sadd.s32 %s405, 4
        %p407 = scmp.lt.s32.totalorder %s25, 1
        %s408 = scalar_select %p407, %s25, 1
        %p409 = scmp.lt.s32.totalorder %s406, 17
        %s410 = scalar_select %p409, %s406, 17
        %s411 = smul.addr %s410, 3
        %s412 = smul.addr %s408, 54
        %s413 = sadd.s32 %s411, %s412
        %s414 = smul.addr %s413, 8
        %s415 = scalar_lea.vmem %s5, %s414
        %s416 = smul.u32 %s26, 4
        %s417 = sadd.s32 %s416, 4
        %s418 = smul.u32 %s26, 4
        %s419 = sadd.s32 %s418, 5
        %p420 = scmp.lt.s32.totalorder %s25, 1
        %s421 = scalar_select %p420, %s25, 1
        %p422 = scmp.lt.s32.totalorder %s419, 17
        %s423 = scalar_select %p422, %s419, 17
        %s424 = smul.addr %s423, 3
        %s425 = smul.addr %s421, 54
        %s426 = sadd.s32 %s424, %s425
        %s427 = smul.addr %s426, 8
        %s428 = scalar_lea.vmem %s6, %s427
        %s429 = smul.u32 %s26, 4
        %s430 = sadd.s32 %s429, 5
        %s431 = smul.u32 4, %s26
        %v433 = vld [vmem:[%s398] sm:$0xff]
        %v434 = vld [vmem:[%s398 + $0x8] sm:$0xff]
        %v435 = vld [vmem:[%s398 + $0x10] sm:$0x3]
        %v436 = vld [vmem:[%s398 + $0x18] sm:$0xff]
        %v437 = vld [vmem:[%s398 + $0x20] sm:$0xff]
        %v438 = vld [vmem:[%s398 + $0x28] sm:$0x3]
        %v439 = vld [vmem:[%s398 + $0x30] sm:$0xff]
        %v440 = vld [vmem:[%s398 + $0x38] sm:$0xff]
        %v441 = vld [vmem:[%s398 + $0x40] sm:$0x3]
        %v442 = vld [vmem:[%s398 + $0x48] sm:$0xff]
        %v443 = vld [vmem:[%s398 + $0x50] sm:$0xff]
        %v444 = vld [vmem:[%s398 + $0x58] sm:$0x3]
        %v445 = vld [vmem:[%s415] sm:$0xff]
        %v446 = vld [vmem:[%s415 + $0x8] sm:$0xff]
        %v447 = vld [vmem:[%s415 + $0x10] sm:$0x3]
        %v448 = vld [vmem:[%s428] sm:$0xff]
        %v449 = vld [vmem:[%s428 + $0x8] sm:$0xff]
        %v450 = vld [vmem:[%s428 + $0x10] sm:$0x3]
        %v451 = vld [vmem:[%s0] sm:$0x1]
        %v453 = vlaneseq
        %v454 = vshrl.u32 %v453, 7
        %v455 = vsub.s32 0, %v454
        %v456 = vrot.slane %v451, %v455
        %v458 = vmul.f32 %v433, %v456
        %v459 = vmul.f32 %v434, %v456
        %v460 = vmul.f32 %v435, %v456
        %v461 = vmul.f32 %v436, %v456
        %v462 = vmul.f32 %v437, %v456
        %v463 = vmul.f32 %v438, %v456
        %v464 = vmul.f32 %v439, %v456
        %v465 = vmul.f32 %v440, %v456
        %v466 = vmul.f32 %v441, %v456
        %v467 = vmul.f32 %v442, %v456
        %v468 = vmul.f32 %v443, %v456
        %v469 = vmul.f32 %v444, %v456
        %v470 = vmul.f32 %v445, %v456
        %v471 = vmul.f32 %v446, %v456
        %v472 = vmul.f32 %v447, %v456
        %v473 = vmul.f32 %v448, %v456
        %v474 = vmul.f32 %v449, %v456
        %v475 = vmul.f32 %v450, %v456
        %v476 = vld [vmem:[%s1] sm:$0x1]
        %v478 = vlaneseq
        %v479 = vshrl.u32 %v478, 7
        %v480 = vsub.s32 0, %v479
        %v481 = vrot.slane %v476, %v480
        %v483 = vadd.f32 %v458, %v481
        %v484 = vadd.f32 %v459, %v481
        %v485 = vadd.f32 %v460, %v481
        %v486 = vadd.f32 %v461, %v481
        %v487 = vadd.f32 %v462, %v481
        %v488 = vadd.f32 %v463, %v481
        %v489 = vadd.f32 %v464, %v481
        %v490 = vadd.f32 %v465, %v481
        %v491 = vadd.f32 %v466, %v481
        %v492 = vadd.f32 %v467, %v481
        %v493 = vadd.f32 %v468, %v481
        %v494 = vadd.f32 %v469, %v481
        %v495 = vadd.f32 %v470, %v481
        %v496 = vadd.f32 %v471, %v481
        %v497 = vadd.f32 %v472, %v481
        %v498 = vadd.f32 %v473, %v481
        %v499 = vadd.f32 %v474, %v481
        %v500 = vadd.f32 %v475, %v481
        %v501 = vmax.f32 %v483, 0.0
        %v502 = vmax.f32 %v484, 0.0
        %v503 = vmax.f32 %v485, 0.0
        %v504 = vmax.f32 %v486, 0.0
        %v505 = vmax.f32 %v487, 0.0
        %v506 = vmax.f32 %v488, 0.0
        %v507 = vmax.f32 %v489, 0.0
        %v508 = vmax.f32 %v490, 0.0
        %v509 = vmax.f32 %v491, 0.0
        %v510 = vmax.f32 %v492, 0.0
        %v511 = vmax.f32 %v493, 0.0
        %v512 = vmax.f32 %v494, 0.0
        %v513 = vmax.f32 %v495, 0.0
        %v514 = vmax.f32 %v496, 0.0
        %v515 = vmax.f32 %v497, 0.0
        %v516 = vmax.f32 %v498, 0.0
        %v517 = vmax.f32 %v499, 0.0
        %v518 = vmax.f32 %v500, 0.0
        %s519 = smul.u32 %s26, 4
        %v520 = vstv %s519
        %v521 = vadd.s32 %v520, 1
        %v522 = vadd.s32 %v520, 2
        %v523 = vadd.s32 %v520, 3
        %v524 = vadd.s32 %v520, 4
        %v525 = vadd.s32 %v520, 5
        %v526 = vlaneseq
        %v527 = vshrl.u32 %v526, 7
        %v528 = vadd.s32 %v527, 8
        %v529 = vadd.s32 %v527, 16
        %vm530 = vcmp.ge.s32.totalorder %v520, 1
        %vm531 = vcmp.ge.s32.totalorder %v521, 1
        %vm532 = vcmp.ge.s32.totalorder %v522, 1
        %vm533 = vcmp.ge.s32.totalorder %v523, 1
        %vm534 = vcmp.ge.s32.totalorder %v524, 1
        %vm535 = vcmp.ge.s32.totalorder %v525, 1
        %vm536 = vcmp.le.s32.totalorder %v520, 16
        %vm537 = vcmp.le.s32.totalorder %v521, 16
        %vm538 = vcmp.le.s32.totalorder %v522, 16
        %vm539 = vcmp.le.s32.totalorder %v523, 16
        %vm540 = vcmp.le.s32.totalorder %v524, 16
        %vm541 = vcmp.le.s32.totalorder %v525, 16
        %vm542 = vmand %vm530, %vm536
        %vm543 = vmand %vm531, %vm537
        %vm544 = vmand %vm532, %vm538
        %vm545 = vmand %vm533, %vm539
        %vm546 = vmand %vm534, %vm540
        %vm547 = vmand %vm535, %vm541
        %vm548 = vcmp.ge.s32.totalorder %v527, 1
        %vm549 = vcmp.ge.s32.totalorder %v528, 1
        %vm550 = vcmp.ge.s32.totalorder %v529, 1
        %v551 = vsel %vm542, 1, 0
        %v552 = vsel %vm543, 1, 0
        %v553 = vsel %vm544, 1, 0
        %v554 = vsel %vm545, 1, 0
        %v555 = vsel %vm546, 1, 0
        %v556 = vsel %vm547, 1, 0
        %vm557 = vcmp.eq.s32.totalorder %v551, 1
        %vm558 = vcmp.eq.s32.totalorder %v552, 1
        %vm559 = vcmp.eq.s32.totalorder %v553, 1
        %vm560 = vcmp.eq.s32.totalorder %v554, 1
        %vm561 = vcmp.eq.s32.totalorder %v555, 1
        %vm562 = vcmp.eq.s32.totalorder %v556, 1
        %v563 = vsel %vm548, 1, 0
        %v564 = vsel %vm549, 1, 0
        %v565 = vsel %vm550, 1, 0
        %vm566 = vcmp.eq.s32.totalorder %v563, 1
        %vm567 = vcmp.eq.s32.totalorder %v564, 1
        %vm568 = vcmp.eq.s32.totalorder %v565, 1
        %vm569 = vmand %vm557, %vm566
        %vm570 = vmand %vm557, %vm567
        %vm571 = vmand %vm557, %vm568
        %vm572 = vmand %vm558, %vm566
        %vm573 = vmand %vm558, %vm567
        %vm574 = vmand %vm558, %vm568
        %vm575 = vmand %vm559, %vm566
        %vm576 = vmand %vm559, %vm567
        %vm577 = vmand %vm559, %vm568
        %vm578 = vmand %vm560, %vm566
        %vm579 = vmand %vm560, %vm567
        %vm580 = vmand %vm560, %vm568
        %vm581 = vmand %vm561, %vm566
        %vm582 = vmand %vm561, %vm567
        %vm583 = vmand %vm561, %vm568
        %vm584 = vmand %vm562, %vm566
        %vm585 = vmand %vm562, %vm567
        %vm586 = vmand %vm562, %vm568
        %vm587 = vcmp.le.s32.totalorder %v527, 16
        %vm588 = vcmp.le.s32.totalorder %v528, 16
        %vm589 = vcmp.le.s32.totalorder %v529, 16
        %v590 = vsel %vm587, 1, 0
        %v591 = vsel %vm588, 1, 0
        %v592 = vsel %vm589, 1, 0
        %vm593 = vcmp.eq.s32.totalorder %v590, 1
        %vm594 = vcmp.eq.s32.totalorder %v591, 1
        %vm595 = vcmp.eq.s32.totalorder %v592, 1
        %vm596 = vmand %vm569, %vm593
        %vm597 = vmand %vm570, %vm594
        %vm598 = vmand %vm571, %vm595
        %vm599 = vmand %vm572, %vm593
        %vm600 = vmand %vm573, %vm594
        %vm601 = vmand %vm574, %vm595
        %vm602 = vmand %vm575, %vm593
        %vm603 = vmand %vm576, %vm594
        %vm604 = vmand %vm577, %vm595
        %vm605 = vmand %vm578, %vm593
        %vm606 = vmand %vm579, %vm594
        %vm607 = vmand %vm580, %vm595
        %vm608 = vmand %vm581, %vm593
        %vm609 = vmand %vm582, %vm594
        %vm610 = vmand %vm583, %vm595
        %vm611 = vmand %vm584, %vm593
        %vm612 = vmand %vm585, %vm594
        %vm613 = vmand %vm586, %vm595
        %v614 = vsel %vm596, 1, 0
        %v615 = vsel %vm597, 1, 0
        %v616 = vsel %vm598, 1, 0
        %v617 = vsel %vm599, 1, 0
        %v618 = vsel %vm600, 1, 0
        %v619 = vsel %vm601, 1, 0
        %v620 = vsel %vm602, 1, 0
        %v621 = vsel %vm603, 1, 0
        %v622 = vsel %vm604, 1, 0
        %v623 = vsel %vm605, 1, 0
        %v624 = vsel %vm606, 1, 0
        %v625 = vsel %vm607, 1, 0
        %v626 = vsel %vm608, 1, 0
        %v627 = vsel %vm609, 1, 0
        %v628 = vsel %vm610, 1, 0
        %v629 = vsel %vm611, 1, 0
        %v630 = vsel %vm612, 1, 0
        %v631 = vsel %vm613, 1, 0
        %vm632 = vcmp.eq.s32.totalorder %v614, 1
        %vm633 = vcmp.eq.s32.totalorder %v615, 1
        %vm634 = vcmp.eq.s32.totalorder %v616, 1
        %vm635 = vcmp.eq.s32.totalorder %v617, 1
        %vm636 = vcmp.eq.s32.totalorder %v618, 1
        %vm637 = vcmp.eq.s32.totalorder %v619, 1
        %vm638 = vcmp.eq.s32.totalorder %v620, 1
        %vm639 = vcmp.eq.s32.totalorder %v621, 1
        %vm640 = vcmp.eq.s32.totalorder %v622, 1
        %vm641 = vcmp.eq.s32.totalorder %v623, 1
        %vm642 = vcmp.eq.s32.totalorder %v624, 1
        %vm643 = vcmp.eq.s32.totalorder %v625, 1
        %vm644 = vcmp.eq.s32.totalorder %v626, 1
        %vm645 = vcmp.eq.s32.totalorder %v627, 1
        %vm646 = vcmp.eq.s32.totalorder %v628, 1
        %vm647 = vcmp.eq.s32.totalorder %v629, 1
        %vm648 = vcmp.eq.s32.totalorder %v630, 1
        %vm649 = vcmp.eq.s32.totalorder %v631, 1
        %v650 = vsel %vm632, %v501, 0.0
        %v651 = vsel %vm633, %v502, 0.0
        %v652 = vsel %vm634, %v503, 0.0
        %v653 = vsel %vm635, %v504, 0.0
        %v654 = vsel %vm636, %v505, 0.0
        %v655 = vsel %vm637, %v506, 0.0
        %v656 = vsel %vm638, %v507, 0.0
        %v657 = vsel %vm639, %v508, 0.0
        %v658 = vsel %vm640, %v509, 0.0
        %v659 = vsel %vm641, %v510, 0.0
        %v660 = vsel %vm642, %v511, 0.0
        %v661 = vsel %vm643, %v512, 0.0
        %v662 = vsel %vm644, %v513, 0.0
        %v663 = vsel %vm645, %v514, 0.0
        %v664 = vsel %vm646, %v515, 0.0
        %v665 = vsel %vm647, %v516, 0.0
        %v666 = vsel %vm648, %v517, 0.0
        %v667 = vsel %vm649, %v518, 0.0
        %v668 = vpack.c.bf16 %v651, %v650
        %v669 = vpack.c.bf16 %v652, %v652
        %v670 = vpack.c.bf16 %v654, %v653
        %v671 = vpack.c.bf16 %v655, %v655
        %v672 = vpack.c.bf16 %v657, %v656
        %v673 = vpack.c.bf16 %v658, %v658
        %v674 = vpack.c.bf16 %v660, %v659
        %v675 = vpack.c.bf16 %v661, %v661
        %v676 = vpack.c.bf16 %v663, %v662
        %v677 = vpack.c.bf16 %v664, %v664
        %v678 = vpack.c.bf16 %v666, %v665
        %v679 = vpack.c.bf16 %v667, %v667
        %vm680 = vsmask.f32 7424
        %v682 = vshrl.u32 %v668, 16
        %v684 = vshll.u32 %v668, 16
        %v686 = vrot.slane %v684, 1
        %v687 = vor.u32 %v682, %v686
        %v689 = vshll.u32 %v669, 16
        %v691 = vrot.slane %v689, 1
        %v692 = vsel %vm680, %v687, %v691
        %v694 = vshrl.u32 %v670, 16
        %v696 = vshll.u32 %v670, 16
        %v698 = vrot.slane %v696, 1
        %v699 = vor.u32 %v694, %v698
        %v701 = vshll.u32 %v671, 16
        %v703 = vrot.slane %v701, 1
        %v704 = vsel %vm680, %v699, %v703
        %v706 = vshrl.u32 %v672, 16
        %v708 = vshll.u32 %v672, 16
        %v710 = vrot.slane %v708, 1
        %v711 = vor.u32 %v706, %v710
        %v713 = vshll.u32 %v673, 16
        %v715 = vrot.slane %v713, 1
        %v716 = vsel %vm680, %v711, %v715
        %v718 = vshrl.u32 %v674, 16
        %v720 = vshll.u32 %v674, 16
        %v722 = vrot.slane %v720, 1
        %v723 = vor.u32 %v718, %v722
        %v725 = vshll.u32 %v675, 16
        %v727 = vrot.slane %v725, 1
        %v728 = vsel %vm680, %v723, %v727
        %v730 = vshrl.u32 %v676, 16
        %v732 = vshll.u32 %v676, 16
        %v734 = vrot.slane %v732, 1
        %v735 = vor.u32 %v730, %v734
        %v737 = vshll.u32 %v677, 16
        %v739 = vrot.slane %v737, 1
        %v740 = vsel %vm680, %v735, %v739
        %v742 = vshrl.u32 %v678, 16
        %v744 = vshll.u32 %v678, 16
        %v746 = vrot.slane %v744, 1
        %v747 = vor.u32 %v742, %v746
        %v749 = vshll.u32 %v679, 16
        %v751 = vrot.slane %v749, 1
        %v752 = vsel %vm680, %v747, %v751
        %vm771 = vcmask 1046528
        %v772 = vrot.slane %v668, 1
        %v773 = vrot.slane %v669, 1
        %v774 = vsel %vm771, %v772, %v773
        %v775 = vrot.slane %v670, 1
        %v776 = vrot.slane %v671, 1
        %v777 = vsel %vm771, %v775, %v776
        %v778 = vrot.slane %v672, 1
        %v779 = vrot.slane %v673, 1
        %v780 = vsel %vm771, %v778, %v779
        %v781 = vrot.slane %v674, 1
        %v782 = vrot.slane %v675, 1
        %v783 = vsel %vm771, %v781, %v782
        %v784 = vrot.slane %v676, 1
        %v785 = vrot.slane %v677, 1
        %v786 = vsel %vm771, %v784, %v785
        %v787 = vrot.slane %v678, 1
        %v788 = vrot.slane %v679, 1
        %v789 = vsel %vm771, %v787, %v788
        %v796 = vld [vmem:[%s2] sm:$0xf]
        %v797 = vld [vmem:[%s2 + $0x4] sm:$0xf]
        %v798 = vld [vmem:[%s2 + $0x8] sm:$0xf]
        %v799 = vld [vmem:[%s2 + $0xc] sm:$0xf]
        %v800 = vld [vmem:[%s2 + $0x10] sm:$0xf]
        %v801 = vld [vmem:[%s2 + $0x14] sm:$0xf]
        %v802 = vld [vmem:[%s2 + $0x18] sm:$0xf]
        %v803 = vld [vmem:[%s2 + $0x1c] sm:$0xf]
        %v804 = vld [vmem:[%s2 + $0x20] sm:$0xf]
        %v805 = vld [vmem:[%s2 + $0x24] sm:$0xf]
        %v806 = vld [vmem:[%s2 + $0x28] sm:$0xf]
        %v807 = vld [vmem:[%s2 + $0x2c] sm:$0xf]
        %v808 = vld [vmem:[%s2 + $0x30] sm:$0xf]
        %v809 = vld [vmem:[%s2 + $0x34] sm:$0xf]
        %v810 = vld [vmem:[%s2 + $0x38] sm:$0xf]
        %v811 = vld [vmem:[%s2 + $0x3c] sm:$0xf]
        %v812 = vld [vmem:[%s2 + $0x40] sm:$0xf]
        %v813 = vld [vmem:[%s2 + $0x44] sm:$0xf]
        %v814 = vld [vmem:[%s2 + $0x48] sm:$0xf]
        %v815 = vld [vmem:[%s2 + $0x4c] sm:$0xf]
        %v816 = vld [vmem:[%s2 + $0x50] sm:$0xf]
        %v817 = vld [vmem:[%s2 + $0x54] sm:$0xf]
        %v818 = vld [vmem:[%s2 + $0x58] sm:$0xf]
        %v819 = vld [vmem:[%s2 + $0x5c] sm:$0xf]
        %v820 = vld [vmem:[%s2 + $0x60] sm:$0xf]
        %v821 = vld [vmem:[%s2 + $0x64] sm:$0xf]
        %v822 = vld [vmem:[%s2 + $0x68] sm:$0xf]
        %v823 = vld [vmem:[%s2 + $0x6c] sm:$0xf]
        %v824 = vld [vmem:[%s2 + $0x70] sm:$0xf]
        %v825 = vld [vmem:[%s2 + $0x74] sm:$0xf]
        %v826 = vld [vmem:[%s2 + $0x78] sm:$0xf]
        %v827 = vld [vmem:[%s2 + $0x7c] sm:$0xf]
        %v828 = vld [vmem:[%s2 + $0x80] sm:$0xf]
        %v829 = vld [vmem:[%s2 + $0x84] sm:$0xf]
        %v830 = vld [vmem:[%s2 + $0x88] sm:$0xf]
        %v831 = vld [vmem:[%s2 + $0x8c] sm:$0xf]
        %v832 = vld [vmem:[%s2 + $0x90] sm:$0xf]
        %v833 = vld [vmem:[%s2 + $0x94] sm:$0xf]
        %v834 = vld [vmem:[%s2 + $0x98] sm:$0xf]
        %v835 = vld [vmem:[%s2 + $0x9c] sm:$0xf]
        %v836 = vld [vmem:[%s2 + $0xa0] sm:$0xf]
        %v837 = vld [vmem:[%s2 + $0xa4] sm:$0xf]
        %v838 = vld [vmem:[%s2 + $0xa8] sm:$0xf]
        %v839 = vld [vmem:[%s2 + $0xac] sm:$0xf]
        %v840 = vld [vmem:[%s2 + $0xb0] sm:$0xf]
        %v841 = vld [vmem:[%s2 + $0xb4] sm:$0xf]
        %v842 = vld [vmem:[%s2 + $0xb8] sm:$0xf]
        %v843 = vld [vmem:[%s2 + $0xbc] sm:$0xf]
        %s844 = scalar_lea.vmem %s2, 192
        %v845 = vld [vmem:[%s844] sm:$0xf]
        %v846 = vld [vmem:[%s844 + $0x4] sm:$0xf]
        %v847 = vld [vmem:[%s844 + $0x8] sm:$0xf]
        %v848 = vld [vmem:[%s844 + $0xc] sm:$0xf]
        %v849 = vld [vmem:[%s844 + $0x10] sm:$0xf]
        %v850 = vld [vmem:[%s844 + $0x14] sm:$0xf]
        %v851 = vld [vmem:[%s844 + $0x18] sm:$0xf]
        %v852 = vld [vmem:[%s844 + $0x1c] sm:$0xf]
        %v853 = vld [vmem:[%s844 + $0x20] sm:$0xf]
        %v854 = vld [vmem:[%s844 + $0x24] sm:$0xf]
        %v855 = vld [vmem:[%s844 + $0x28] sm:$0xf]
        %v856 = vld [vmem:[%s844 + $0x2c] sm:$0xf]
        %v857 = vld [vmem:[%s844 + $0x30] sm:$0xf]
        %v858 = vld [vmem:[%s844 + $0x34] sm:$0xf]
        %v859 = vld [vmem:[%s844 + $0x38] sm:$0xf]
        %v860 = vld [vmem:[%s844 + $0x3c] sm:$0xf]
        %v861 = vld [vmem:[%s844 + $0x40] sm:$0xf]
        %v862 = vld [vmem:[%s844 + $0x44] sm:$0xf]
        %v863 = vld [vmem:[%s844 + $0x48] sm:$0xf]
        %v864 = vld [vmem:[%s844 + $0x4c] sm:$0xf]
        %v865 = vld [vmem:[%s844 + $0x50] sm:$0xf]
        %v866 = vld [vmem:[%s844 + $0x54] sm:$0xf]
        %v867 = vld [vmem:[%s844 + $0x58] sm:$0xf]
        %v868 = vld [vmem:[%s844 + $0x5c] sm:$0xf]
        %v869 = vld [vmem:[%s844 + $0x60] sm:$0xf]
        %v870 = vld [vmem:[%s844 + $0x64] sm:$0xf]
        %v871 = vld [vmem:[%s844 + $0x68] sm:$0xf]
        %v872 = vld [vmem:[%s844 + $0x6c] sm:$0xf]
        %v873 = vld [vmem:[%s844 + $0x70] sm:$0xf]
        %v874 = vld [vmem:[%s844 + $0x74] sm:$0xf]
        %v875 = vld [vmem:[%s844 + $0x78] sm:$0xf]
        %v876 = vld [vmem:[%s844 + $0x7c] sm:$0xf]
        %v877 = vld [vmem:[%s844 + $0x80] sm:$0xf]
        %v878 = vld [vmem:[%s844 + $0x84] sm:$0xf]
        %v879 = vld [vmem:[%s844 + $0x88] sm:$0xf]
        %v880 = vld [vmem:[%s844 + $0x8c] sm:$0xf]
        %v881 = vld [vmem:[%s844 + $0x90] sm:$0xf]
        %v882 = vld [vmem:[%s844 + $0x94] sm:$0xf]
        %v883 = vld [vmem:[%s844 + $0x98] sm:$0xf]
        %v884 = vld [vmem:[%s844 + $0x9c] sm:$0xf]
        %v885 = vld [vmem:[%s844 + $0xa0] sm:$0xf]
        %v886 = vld [vmem:[%s844 + $0xa4] sm:$0xf]
        %v887 = vld [vmem:[%s844 + $0xa8] sm:$0xf]
        %v888 = vld [vmem:[%s844 + $0xac] sm:$0xf]
        %v889 = vld [vmem:[%s844 + $0xb0] sm:$0xf]
        %v890 = vld [vmem:[%s844 + $0xb4] sm:$0xf]
        %v891 = vld [vmem:[%s844 + $0xb8] sm:$0xf]
        %v892 = vld [vmem:[%s844 + $0xbc] sm:$0xf]
        %v941 = vunpack.c.l.b16 %v845
        %v942 = vunpack.c.l.b16 %v846
        %v943 = vunpack.c.l.b16 %v847
        %v944 = vunpack.c.l.b16 %v848
        %v945 = vunpack.c.l.b16 %v849
        %v946 = vunpack.c.l.b16 %v850
        %v947 = vunpack.c.l.b16 %v851
        %v948 = vunpack.c.l.b16 %v852
        %v949 = vunpack.c.l.b16 %v853
        %v950 = vunpack.c.l.b16 %v854
        %v951 = vunpack.c.l.b16 %v855
        %v952 = vunpack.c.l.b16 %v856
        %v953 = vunpack.c.l.b16 %v857
        %v954 = vunpack.c.l.b16 %v858
        %v955 = vunpack.c.l.b16 %v859
        %v956 = vunpack.c.l.b16 %v860
        %v957 = vunpack.c.l.b16 %v861
        %v958 = vunpack.c.l.b16 %v862
        %v959 = vunpack.c.l.b16 %v863
        %v960 = vunpack.c.l.b16 %v864
        %v961 = vunpack.c.l.b16 %v865
        %v962 = vunpack.c.l.b16 %v866
        %v963 = vunpack.c.l.b16 %v867
        %v964 = vunpack.c.l.b16 %v868
        %v965 = vunpack.c.l.b16 %v869
        %v966 = vunpack.c.l.b16 %v870
        %v967 = vunpack.c.l.b16 %v871
        %v968 = vunpack.c.l.b16 %v872
        %v969 = vunpack.c.l.b16 %v873
        %v970 = vunpack.c.l.b16 %v874
        %v971 = vunpack.c.l.b16 %v875
        %v972 = vunpack.c.l.b16 %v876
        %v973 = vunpack.c.l.b16 %v877
        %v974 = vunpack.c.l.b16 %v878
        %v975 = vunpack.c.l.b16 %v879
        %v976 = vunpack.c.l.b16 %v880
        %v977 = vunpack.c.l.b16 %v881
        %v978 = vunpack.c.l.b16 %v882
        %v979 = vunpack.c.l.b16 %v883
        %v980 = vunpack.c.l.b16 %v884
        %v981 = vunpack.c.l.b16 %v885
        %v982 = vunpack.c.l.b16 %v886
        %v983 = vunpack.c.l.b16 %v887
        %v984 = vunpack.c.l.b16 %v888
        %v985 = vunpack.c.l.b16 %v889
        %v986 = vunpack.c.l.b16 %v890
        %v987 = vunpack.c.l.b16 %v891
        %v988 = vunpack.c.l.b16 %v892
        %v989 = vpack.c.b16 %v942, %v941
        %v990 = vpack.c.b16 %v944, %v943
        %v991 = vpack.c.b16 %v946, %v945
        %v992 = vpack.c.b16 %v948, %v947
        %v993 = vpack.c.b16 %v950, %v949
        %v994 = vpack.c.b16 %v952, %v951
        %v995 = vpack.c.b16 %v954, %v953
        %v996 = vpack.c.b16 %v956, %v955
        %v997 = vpack.c.b16 %v958, %v957
        %v998 = vpack.c.b16 %v960, %v959
        %v999 = vpack.c.b16 %v962, %v961
        %v1000 = vpack.c.b16 %v964, %v963
        %v1001 = vpack.c.b16 %v966, %v965
        %v1002 = vpack.c.b16 %v968, %v967
        %v1003 = vpack.c.b16 %v970, %v969
        %v1004 = vpack.c.b16 %v972, %v971
        %v1005 = vpack.c.b16 %v974, %v973
        %v1006 = vpack.c.b16 %v976, %v975
        %v1007 = vpack.c.b16 %v978, %v977
        %v1008 = vpack.c.b16 %v980, %v979
        %v1009 = vpack.c.b16 %v982, %v981
        %v1010 = vpack.c.b16 %v984, %v983
        %v1011 = vpack.c.b16 %v986, %v985
        %v1012 = vpack.c.b16 %v988, %v987
        %1037 = vmatprep.subr.bf16.mxu0 0
        %1038 = vmatpush1.bf16.msra.mxu0 %v996
        %1039 = vmatprep.subr.bf16.mxu0 0
        %1040 = vmatpush1.bf16.msra.mxu0 %v995
        %1041 = vmatprep.subr.bf16.mxu0 0
        %1042 = vmatpush1.bf16.msra.mxu0 %v994
        %1043 = vmatprep.subr.bf16.mxu0 0
        %1044 = vmatpush1.bf16.msra.mxu0 %v993
        %1045 = vmatprep.subr.bf16.mxu0 0
        %1046 = vmatpush1.bf16.msra.mxu0 %v992
        %1047 = vmatprep.subr.bf16.mxu0 0
        %1048 = vmatpush1.bf16.msra.mxu0 %v991
        %1049 = vmatprep.subr.bf16.mxu0 0
        %1050 = vmatpush1.bf16.msra.mxu0 %v990
        %1051 = vmatprep.subr.bf16.mxu0 0
        %1052 = vmatpush1.bf16.msra.mxu0 %v989
        %1053 = vmatprep.subr.bf16.mxu0 0
        %1054 = vmatpush2.bf16.msra.mxu0 %v1004
        %1055 = vmatprep.subr.bf16.mxu0 0
        %1056 = vmatpush2.bf16.msra.mxu0 %v1003
        %1057 = vmatprep.subr.bf16.mxu0 0
        %1058 = vmatpush2.bf16.msra.mxu0 %v1002
        %1059 = vmatprep.subr.bf16.mxu0 0
        %1060 = vmatpush2.bf16.msra.mxu0 %v1001
        %1061 = vmatprep.subr.bf16.mxu0 0
        %1062 = vmatpush2.bf16.msra.mxu0 %v1000
        %1063 = vmatprep.subr.bf16.mxu0 0
        %1064 = vmatpush2.bf16.msra.mxu0 %v999
        %1065 = vmatprep.subr.bf16.mxu0 0
        %1066 = vmatpush2.bf16.msra.mxu0 %v998
        %1067 = vmatprep.subr.bf16.mxu0 0
        %1068 = vmatpush2.bf16.msra.mxu0 %v997
        %1069 = vmatprep.mubr.bf16.mxu0 %v704
        %1070 = vmatmul.mubr.bf16.gmra.mxu0 %v670
        %v1071 = vpop.f32.mrf.mxu0
        %v1072 = vadd.f32 0.0, %v1071
        %v1073 = vpop.f32.mrf.mxu0
        %v1074 = vpop.f32.mrf.mxu0
        %v1075 = vadd.f32 0.0, %v1074
        %v1076 = vpop.f32.mrf.mxu0
        %1077 = vmatprep.mubr.bf16.mxu0 %v716
        %1078 = vmatmul.mubr.bf16.gmra.mxu0 %v672
        %v1079 = vpop.f32.mrf.mxu0
        %v1080 = vadd.f32 0.0, %v1079
        %v1081 = vpop.f32.mrf.mxu0
        %v1082 = vpop.f32.mrf.mxu0
        %v1083 = vadd.f32 0.0, %v1082
        %v1084 = vpop.f32.mrf.mxu0
        %1085 = vmatprep.mubr.bf16.mxu0 %v728
        %1086 = vmatmul.mubr.bf16.gmra.mxu0 %v674
        %v1087 = vpop.f32.mrf.mxu0
        %v1088 = vadd.f32 0.0, %v1087
        %v1089 = vpop.f32.mrf.mxu0
        %v1090 = vpop.f32.mrf.mxu0
        %v1091 = vadd.f32 0.0, %v1090
        %v1092 = vpop.f32.mrf.mxu0
        %1093 = vmatprep.mubr.bf16.mxu0 %v740
        %1094 = vmatmul.mubr.bf16.gmra.mxu0 %v676
        %v1095 = vpop.f32.mrf.mxu0
        %v1096 = vadd.f32 0.0, %v1095
        %v1097 = vpop.f32.mrf.mxu0
        %v1098 = vpop.f32.mrf.mxu0
        %v1099 = vadd.f32 0.0, %v1098
        %v1100 = vpop.f32.mrf.mxu0
        %1101 = vdwg.mxu0
        %1102 = vmatprep.subr.bf16.mxu0 0
        %1103 = vmatpush1.bf16.msra.mxu0 %v1012
        %1104 = vmatprep.subr.bf16.mxu0 0
        %1105 = vmatpush1.bf16.msra.mxu0 %v1011
        %1106 = vmatprep.subr.bf16.mxu0 0
        %1107 = vmatpush1.bf16.msra.mxu0 %v1010
        %1108 = vmatprep.subr.bf16.mxu0 0
        %1109 = vmatpush1.bf16.msra.mxu0 %v1009
        %1110 = vmatprep.subr.bf16.mxu0 0
        %1111 = vmatpush1.bf16.msra.mxu0 %v1008
        %1112 = vmatprep.subr.bf16.mxu0 0
        %1113 = vmatpush1.bf16.msra.mxu0 %v1007
        %1114 = vmatprep.subr.bf16.mxu0 0
        %1115 = vmatpush1.bf16.msra.mxu0 %v1006
        %1116 = vmatprep.subr.bf16.mxu0 0
        %1117 = vmatpush1.bf16.msra.mxu0 %v1005
        %1118 = vmatprep.subr.bf16.mxu0 0
        %1119 = vmatpush2.bf16.msra.mxu0 0
        %1120 = vmatprep.subr.bf16.mxu0 0
        %1121 = vmatpush2.bf16.msra.mxu0 0
        %1122 = vmatprep.subr.bf16.mxu0 0
        %1123 = vmatpush2.bf16.msra.mxu0 0
        %1124 = vmatprep.subr.bf16.mxu0 0
        %1125 = vmatpush2.bf16.msra.mxu0 0
        %1126 = vmatprep.subr.bf16.mxu0 0
        %1127 = vmatpush2.bf16.msra.mxu0 0
        %1128 = vmatprep.subr.bf16.mxu0 0
        %1129 = vmatpush2.bf16.msra.mxu0 0
        %1130 = vmatprep.subr.bf16.mxu0 0
        %1131 = vmatpush2.bf16.msra.mxu0 0
        %1132 = vmatprep.subr.bf16.mxu0 0
        %1133 = vmatpush2.bf16.msra.mxu0 0
        %1134 = vmatprep.mubr.bf16.mxu0 0
        %1135 = vmatmul.mubr.bf16.gmra.mxu0 %v777
        %v1136 = vpop.f32.mrf.mxu0
        %v1137 = vadd.f32 %v1072, %v1136
        %v1138 = vpop.f32.mrf.mxu0
        %v1139 = vpop.f32.mrf.mxu0
        %v1140 = vadd.f32 %v1075, %v1139
        %v1141 = vpop.f32.mrf.mxu0
        %1142 = vmatprep.mubr.bf16.mxu0 0
        %1143 = vmatmul.mubr.bf16.gmra.mxu0 %v780
        %v1144 = vpop.f32.mrf.mxu0
        %v1145 = vadd.f32 %v1080, %v1144
        %v1146 = vpop.f32.mrf.mxu0
        %v1147 = vpop.f32.mrf.mxu0
        %v1148 = vadd.f32 %v1083, %v1147
        %v1149 = vpop.f32.mrf.mxu0
        %1150 = vmatprep.mubr.bf16.mxu0 0
        %1151 = vmatmul.mubr.bf16.gmra.mxu0 %v783
        %v1152 = vpop.f32.mrf.mxu0
        %v1153 = vadd.f32 %v1088, %v1152
        %v1154 = vpop.f32.mrf.mxu0
        %v1155 = vpop.f32.mrf.mxu0
        %v1156 = vadd.f32 %v1091, %v1155
        %v1157 = vpop.f32.mrf.mxu0
        %1158 = vmatprep.mubr.bf16.mxu0 0
        %1159 = vmatmul.mubr.bf16.gmra.mxu0 %v786
        %v1160 = vpop.f32.mrf.mxu0
        %v1161 = vadd.f32 %v1096, %v1160
        %v1162 = vpop.f32.mrf.mxu0
        %v1163 = vpop.f32.mrf.mxu0
        %v1164 = vadd.f32 %v1099, %v1163
        %v1165 = vpop.f32.mrf.mxu0
        %1166 = vdwg.mxu0
        %v1215 = vunpack.c.l.b16 %v796
        %v1216 = vunpack.c.l.b16 %v797
        %v1217 = vunpack.c.l.b16 %v798
        %v1218 = vunpack.c.l.b16 %v799
        %v1219 = vunpack.c.l.b16 %v800
        %v1220 = vunpack.c.l.b16 %v801
        %v1221 = vunpack.c.l.b16 %v802
        %v1222 = vunpack.c.l.b16 %v803
        %v1223 = vunpack.c.l.b16 %v804
        %v1224 = vunpack.c.l.b16 %v805
        %v1225 = vunpack.c.l.b16 %v806
        %v1226 = vunpack.c.l.b16 %v807
        %v1227 = vunpack.c.l.b16 %v808
        %v1228 = vunpack.c.l.b16 %v809
        %v1229 = vunpack.c.l.b16 %v810
        %v1230 = vunpack.c.l.b16 %v811
        %v1231 = vunpack.c.l.b16 %v812
        %v1232 = vunpack.c.l.b16 %v813
        %v1233 = vunpack.c.l.b16 %v814
        %v1234 = vunpack.c.l.b16 %v815
        %v1235 = vunpack.c.l.b16 %v816
        %v1236 = vunpack.c.l.b16 %v817
        %v1237 = vunpack.c.l.b16 %v818
        %v1238 = vunpack.c.l.b16 %v819
        %v1239 = vunpack.c.l.b16 %v820
        %v1240 = vunpack.c.l.b16 %v821
        %v1241 = vunpack.c.l.b16 %v822
        %v1242 = vunpack.c.l.b16 %v823
        %v1243 = vunpack.c.l.b16 %v824
        %v1244 = vunpack.c.l.b16 %v825
        %v1245 = vunpack.c.l.b16 %v826
        %v1246 = vunpack.c.l.b16 %v827
        %v1247 = vunpack.c.l.b16 %v828
        %v1248 = vunpack.c.l.b16 %v829
        %v1249 = vunpack.c.l.b16 %v830
        %v1250 = vunpack.c.l.b16 %v831
        %v1251 = vunpack.c.l.b16 %v832
        %v1252 = vunpack.c.l.b16 %v833
        %v1253 = vunpack.c.l.b16 %v834
        %v1254 = vunpack.c.l.b16 %v835
        %v1255 = vunpack.c.l.b16 %v836
        %v1256 = vunpack.c.l.b16 %v837
        %v1257 = vunpack.c.l.b16 %v838
        %v1258 = vunpack.c.l.b16 %v839
        %v1259 = vunpack.c.l.b16 %v840
        %v1260 = vunpack.c.l.b16 %v841
        %v1261 = vunpack.c.l.b16 %v842
        %v1262 = vunpack.c.l.b16 %v843
        %v1263 = vpack.c.b16 %v1216, %v1215
        %v1264 = vpack.c.b16 %v1218, %v1217
        %v1265 = vpack.c.b16 %v1220, %v1219
        %v1266 = vpack.c.b16 %v1222, %v1221
        %v1267 = vpack.c.b16 %v1224, %v1223
        %v1268 = vpack.c.b16 %v1226, %v1225
        %v1269 = vpack.c.b16 %v1228, %v1227
        %v1270 = vpack.c.b16 %v1230, %v1229
        %v1271 = vpack.c.b16 %v1232, %v1231
        %v1272 = vpack.c.b16 %v1234, %v1233
        %v1273 = vpack.c.b16 %v1236, %v1235
        %v1274 = vpack.c.b16 %v1238, %v1237
        %v1275 = vpack.c.b16 %v1240, %v1239
        %v1276 = vpack.c.b16 %v1242, %v1241
        %v1277 = vpack.c.b16 %v1244, %v1243
        %v1278 = vpack.c.b16 %v1246, %v1245
        %v1279 = vpack.c.b16 %v1248, %v1247
        %v1280 = vpack.c.b16 %v1250, %v1249
        %v1281 = vpack.c.b16 %v1252, %v1251
        %v1282 = vpack.c.b16 %v1254, %v1253
        %v1283 = vpack.c.b16 %v1256, %v1255
        %v1284 = vpack.c.b16 %v1258, %v1257
        %v1285 = vpack.c.b16 %v1260, %v1259
        %v1286 = vpack.c.b16 %v1262, %v1261
        %1311 = vmatprep.subr.bf16.mxu0 0
        %1312 = vmatpush1.bf16.msra.mxu0 %v1270
        %1313 = vmatprep.subr.bf16.mxu0 0
        %1314 = vmatpush1.bf16.msra.mxu0 %v1269
        %1315 = vmatprep.subr.bf16.mxu0 0
        %1316 = vmatpush1.bf16.msra.mxu0 %v1268
        %1317 = vmatprep.subr.bf16.mxu0 0
        %1318 = vmatpush1.bf16.msra.mxu0 %v1267
        %1319 = vmatprep.subr.bf16.mxu0 0
        %1320 = vmatpush1.bf16.msra.mxu0 %v1266
        %1321 = vmatprep.subr.bf16.mxu0 0
        %1322 = vmatpush1.bf16.msra.mxu0 %v1265
        %1323 = vmatprep.subr.bf16.mxu0 0
        %1324 = vmatpush1.bf16.msra.mxu0 %v1264
        %1325 = vmatprep.subr.bf16.mxu0 0
        %1326 = vmatpush1.bf16.msra.mxu0 %v1263
        %1327 = vmatprep.subr.bf16.mxu0 0
        %1328 = vmatpush2.bf16.msra.mxu0 %v1278
        %1329 = vmatprep.subr.bf16.mxu0 0
        %1330 = vmatpush2.bf16.msra.mxu0 %v1277
        %1331 = vmatprep.subr.bf16.mxu0 0
        %1332 = vmatpush2.bf16.msra.mxu0 %v1276
        %1333 = vmatprep.subr.bf16.mxu0 0
        %1334 = vmatpush2.bf16.msra.mxu0 %v1275
        %1335 = vmatprep.subr.bf16.mxu0 0
        %1336 = vmatpush2.bf16.msra.mxu0 %v1274
        %1337 = vmatprep.subr.bf16.mxu0 0
        %1338 = vmatpush2.bf16.msra.mxu0 %v1273
        %1339 = vmatprep.subr.bf16.mxu0 0
        %1340 = vmatpush2.bf16.msra.mxu0 %v1272
        %1341 = vmatprep.subr.bf16.mxu0 0
        %1342 = vmatpush2.bf16.msra.mxu0 %v1271
        %1343 = vmatprep.mubr.bf16.mxu0 %v692
        %1344 = vmatmul.mubr.bf16.gmra.mxu0 %v668
        %v1345 = vpop.f32.mrf.mxu0
        %v1346 = vadd.f32 %v1137, %v1345
        %v1347 = vpop.f32.mrf.mxu0
        %v1348 = vpop.f32.mrf.mxu0
        %v1349 = vadd.f32 %v1140, %v1348
        %v1350 = vpop.f32.mrf.mxu0
        %1351 = vmatprep.mubr.bf16.mxu0 %v704
        %1352 = vmatmul.mubr.bf16.gmra.mxu0 %v670
        %v1353 = vpop.f32.mrf.mxu0
        %v1354 = vadd.f32 %v1145, %v1353
        %v1355 = vpop.f32.mrf.mxu0
        %v1356 = vpop.f32.mrf.mxu0
        %v1357 = vadd.f32 %v1148, %v1356
        %v1358 = vpop.f32.mrf.mxu0
        %1359 = vmatprep.mubr.bf16.mxu0 %v716
        %1360 = vmatmul.mubr.bf16.gmra.mxu0 %v672
        %v1361 = vpop.f32.mrf.mxu0
        %v1362 = vadd.f32 %v1153, %v1361
        %v1363 = vpop.f32.mrf.mxu0
        %v1364 = vpop.f32.mrf.mxu0
        %v1365 = vadd.f32 %v1156, %v1364
        %v1366 = vpop.f32.mrf.mxu0
        %1367 = vmatprep.mubr.bf16.mxu0 %v728
        %1368 = vmatmul.mubr.bf16.gmra.mxu0 %v674
        %v1369 = vpop.f32.mrf.mxu0
        %v1370 = vadd.f32 %v1161, %v1369
        %v1371 = vpop.f32.mrf.mxu0
        %v1372 = vpop.f32.mrf.mxu0
        %v1373 = vadd.f32 %v1164, %v1372
        %v1374 = vpop.f32.mrf.mxu0
        %1375 = vdwg.mxu0
        %1376 = vmatprep.subr.bf16.mxu0 0
        %1377 = vmatpush1.bf16.msra.mxu0 %v1286
        %1378 = vmatprep.subr.bf16.mxu0 0
        %1379 = vmatpush1.bf16.msra.mxu0 %v1285
        %1380 = vmatprep.subr.bf16.mxu0 0
        %1381 = vmatpush1.bf16.msra.mxu0 %v1284
        %1382 = vmatprep.subr.bf16.mxu0 0
        %1383 = vmatpush1.bf16.msra.mxu0 %v1283
        %1384 = vmatprep.subr.bf16.mxu0 0
        %1385 = vmatpush1.bf16.msra.mxu0 %v1282
        %1386 = vmatprep.subr.bf16.mxu0 0
        %1387 = vmatpush1.bf16.msra.mxu0 %v1281
        %1388 = vmatprep.subr.bf16.mxu0 0
        %1389 = vmatpush1.bf16.msra.mxu0 %v1280
        %1390 = vmatprep.subr.bf16.mxu0 0
        %1391 = vmatpush1.bf16.msra.mxu0 %v1279
        %1392 = vmatprep.subr.bf16.mxu0 0
        %1393 = vmatpush2.bf16.msra.mxu0 0
        %1394 = vmatprep.subr.bf16.mxu0 0
        %1395 = vmatpush2.bf16.msra.mxu0 0
        %1396 = vmatprep.subr.bf16.mxu0 0
        %1397 = vmatpush2.bf16.msra.mxu0 0
        %1398 = vmatprep.subr.bf16.mxu0 0
        %1399 = vmatpush2.bf16.msra.mxu0 0
        %1400 = vmatprep.subr.bf16.mxu0 0
        %1401 = vmatpush2.bf16.msra.mxu0 0
        %1402 = vmatprep.subr.bf16.mxu0 0
        %1403 = vmatpush2.bf16.msra.mxu0 0
        %1404 = vmatprep.subr.bf16.mxu0 0
        %1405 = vmatpush2.bf16.msra.mxu0 0
        %1406 = vmatprep.subr.bf16.mxu0 0
        %1407 = vmatpush2.bf16.msra.mxu0 0
        %1408 = vmatprep.mubr.bf16.mxu0 0
        %1409 = vmatmul.mubr.bf16.gmra.mxu0 %v774
        %v1410 = vpop.f32.mrf.mxu0
        %v1411 = vadd.f32 %v1346, %v1410
        %v1412 = vpop.f32.mrf.mxu0
        %v1413 = vpop.f32.mrf.mxu0
        %v1414 = vadd.f32 %v1349, %v1413
        %v1415 = vpop.f32.mrf.mxu0
        %1416 = vmatprep.mubr.bf16.mxu0 0
        %1417 = vmatmul.mubr.bf16.gmra.mxu0 %v777
        %v1418 = vpop.f32.mrf.mxu0
        %v1419 = vadd.f32 %v1354, %v1418
        %v1420 = vpop.f32.mrf.mxu0
        %v1421 = vpop.f32.mrf.mxu0
        %v1422 = vadd.f32 %v1357, %v1421
        %v1423 = vpop.f32.mrf.mxu0
        %1424 = vmatprep.mubr.bf16.mxu0 0
        %1425 = vmatmul.mubr.bf16.gmra.mxu0 %v780
        %v1426 = vpop.f32.mrf.mxu0
        %v1427 = vadd.f32 %v1362, %v1426
        %v1428 = vpop.f32.mrf.mxu0
        %v1429 = vpop.f32.mrf.mxu0
        %v1430 = vadd.f32 %v1365, %v1429
        %v1431 = vpop.f32.mrf.mxu0
        %1432 = vmatprep.mubr.bf16.mxu0 0
        %1433 = vmatmul.mubr.bf16.gmra.mxu0 %v783
        %v1434 = vpop.f32.mrf.mxu0
        %v1435 = vadd.f32 %v1370, %v1434
        %v1436 = vpop.f32.mrf.mxu0
        %v1437 = vpop.f32.mrf.mxu0
        %v1438 = vadd.f32 %v1373, %v1437
        %v1439 = vpop.f32.mrf.mxu0
        %1440 = vdwg.mxu0
        %s1441 = scalar_lea.vmem %s2, 384
        %v1442 = vld [vmem:[%s1441] sm:$0xf]
        %v1443 = vld [vmem:[%s1441 + $0x4] sm:$0xf]
        %v1444 = vld [vmem:[%s1441 + $0x8] sm:$0xf]
        %v1445 = vld [vmem:[%s1441 + $0xc] sm:$0xf]
        %v1446 = vld [vmem:[%s1441 + $0x10] sm:$0xf]
        %v1447 = vld [vmem:[%s1441 + $0x14] sm:$0xf]
        %v1448 = vld [vmem:[%s1441 + $0x18] sm:$0xf]
        %v1449 = vld [vmem:[%s1441 + $0x1c] sm:$0xf]
        %v1450 = vld [vmem:[%s1441 + $0x20] sm:$0xf]
        %v1451 = vld [vmem:[%s1441 + $0x24] sm:$0xf]
        %v1452 = vld [vmem:[%s1441 + $0x28] sm:$0xf]
        %v1453 = vld [vmem:[%s1441 + $0x2c] sm:$0xf]
        %v1454 = vld [vmem:[%s1441 + $0x30] sm:$0xf]
        %v1455 = vld [vmem:[%s1441 + $0x34] sm:$0xf]
        %v1456 = vld [vmem:[%s1441 + $0x38] sm:$0xf]
        %v1457 = vld [vmem:[%s1441 + $0x3c] sm:$0xf]
        %v1458 = vld [vmem:[%s1441 + $0x40] sm:$0xf]
        %v1459 = vld [vmem:[%s1441 + $0x44] sm:$0xf]
        %v1460 = vld [vmem:[%s1441 + $0x48] sm:$0xf]
        %v1461 = vld [vmem:[%s1441 + $0x4c] sm:$0xf]
        %v1462 = vld [vmem:[%s1441 + $0x50] sm:$0xf]
        %v1463 = vld [vmem:[%s1441 + $0x54] sm:$0xf]
        %v1464 = vld [vmem:[%s1441 + $0x58] sm:$0xf]
        %v1465 = vld [vmem:[%s1441 + $0x5c] sm:$0xf]
        %v1466 = vld [vmem:[%s1441 + $0x60] sm:$0xf]
        %v1467 = vld [vmem:[%s1441 + $0x64] sm:$0xf]
        %v1468 = vld [vmem:[%s1441 + $0x68] sm:$0xf]
        %v1469 = vld [vmem:[%s1441 + $0x6c] sm:$0xf]
        %v1470 = vld [vmem:[%s1441 + $0x70] sm:$0xf]
        %v1471 = vld [vmem:[%s1441 + $0x74] sm:$0xf]
        %v1472 = vld [vmem:[%s1441 + $0x78] sm:$0xf]
        %v1473 = vld [vmem:[%s1441 + $0x7c] sm:$0xf]
        %v1474 = vld [vmem:[%s1441 + $0x80] sm:$0xf]
        %v1475 = vld [vmem:[%s1441 + $0x84] sm:$0xf]
        %v1476 = vld [vmem:[%s1441 + $0x88] sm:$0xf]
        %v1477 = vld [vmem:[%s1441 + $0x8c] sm:$0xf]
        %v1478 = vld [vmem:[%s1441 + $0x90] sm:$0xf]
        %v1479 = vld [vmem:[%s1441 + $0x94] sm:$0xf]
        %v1480 = vld [vmem:[%s1441 + $0x98] sm:$0xf]
        %v1481 = vld [vmem:[%s1441 + $0x9c] sm:$0xf]
        %v1482 = vld [vmem:[%s1441 + $0xa0] sm:$0xf]
        %v1483 = vld [vmem:[%s1441 + $0xa4] sm:$0xf]
        %v1484 = vld [vmem:[%s1441 + $0xa8] sm:$0xf]
        %v1485 = vld [vmem:[%s1441 + $0xac] sm:$0xf]
        %v1486 = vld [vmem:[%s1441 + $0xb0] sm:$0xf]
        %v1487 = vld [vmem:[%s1441 + $0xb4] sm:$0xf]
        %v1488 = vld [vmem:[%s1441 + $0xb8] sm:$0xf]
        %v1489 = vld [vmem:[%s1441 + $0xbc] sm:$0xf]
        %v1538 = vunpack.c.l.b16 %v1442
        %v1539 = vunpack.c.l.b16 %v1443
        %v1540 = vunpack.c.l.b16 %v1444
        %v1541 = vunpack.c.l.b16 %v1445
        %v1542 = vunpack.c.l.b16 %v1446
        %v1543 = vunpack.c.l.b16 %v1447
        %v1544 = vunpack.c.l.b16 %v1448
        %v1545 = vunpack.c.l.b16 %v1449
        %v1546 = vunpack.c.l.b16 %v1450
        %v1547 = vunpack.c.l.b16 %v1451
        %v1548 = vunpack.c.l.b16 %v1452
        %v1549 = vunpack.c.l.b16 %v1453
        %v1550 = vunpack.c.l.b16 %v1454
        %v1551 = vunpack.c.l.b16 %v1455
        %v1552 = vunpack.c.l.b16 %v1456
        %v1553 = vunpack.c.l.b16 %v1457
        %v1554 = vunpack.c.l.b16 %v1458
        %v1555 = vunpack.c.l.b16 %v1459
        %v1556 = vunpack.c.l.b16 %v1460
        %v1557 = vunpack.c.l.b16 %v1461
        %v1558 = vunpack.c.l.b16 %v1462
        %v1559 = vunpack.c.l.b16 %v1463
        %v1560 = vunpack.c.l.b16 %v1464
        %v1561 = vunpack.c.l.b16 %v1465
        %v1562 = vunpack.c.l.b16 %v1466
        %v1563 = vunpack.c.l.b16 %v1467
        %v1564 = vunpack.c.l.b16 %v1468
        %v1565 = vunpack.c.l.b16 %v1469
        %v1566 = vunpack.c.l.b16 %v1470
        %v1567 = vunpack.c.l.b16 %v1471
        %v1568 = vunpack.c.l.b16 %v1472
        %v1569 = vunpack.c.l.b16 %v1473
        %v1570 = vunpack.c.l.b16 %v1474
        %v1571 = vunpack.c.l.b16 %v1475
        %v1572 = vunpack.c.l.b16 %v1476
        %v1573 = vunpack.c.l.b16 %v1477
        %v1574 = vunpack.c.l.b16 %v1478
        %v1575 = vunpack.c.l.b16 %v1479
        %v1576 = vunpack.c.l.b16 %v1480
        %v1577 = vunpack.c.l.b16 %v1481
        %v1578 = vunpack.c.l.b16 %v1482
        %v1579 = vunpack.c.l.b16 %v1483
        %v1580 = vunpack.c.l.b16 %v1484
        %v1581 = vunpack.c.l.b16 %v1485
        %v1582 = vunpack.c.l.b16 %v1486
        %v1583 = vunpack.c.l.b16 %v1487
        %v1584 = vunpack.c.l.b16 %v1488
        %v1585 = vunpack.c.l.b16 %v1489
        %v1586 = vpack.c.b16 %v1539, %v1538
        %v1587 = vpack.c.b16 %v1541, %v1540
        %v1588 = vpack.c.b16 %v1543, %v1542
        %v1589 = vpack.c.b16 %v1545, %v1544
        %v1590 = vpack.c.b16 %v1547, %v1546
        %v1591 = vpack.c.b16 %v1549, %v1548
        %v1592 = vpack.c.b16 %v1551, %v1550
        %v1593 = vpack.c.b16 %v1553, %v1552
        %v1594 = vpack.c.b16 %v1555, %v1554
        %v1595 = vpack.c.b16 %v1557, %v1556
        %v1596 = vpack.c.b16 %v1559, %v1558
        %v1597 = vpack.c.b16 %v1561, %v1560
        %v1598 = vpack.c.b16 %v1563, %v1562
        %v1599 = vpack.c.b16 %v1565, %v1564
        %v1600 = vpack.c.b16 %v1567, %v1566
        %v1601 = vpack.c.b16 %v1569, %v1568
        %v1602 = vpack.c.b16 %v1571, %v1570
        %v1603 = vpack.c.b16 %v1573, %v1572
        %v1604 = vpack.c.b16 %v1575, %v1574
        %v1605 = vpack.c.b16 %v1577, %v1576
        %v1606 = vpack.c.b16 %v1579, %v1578
        %v1607 = vpack.c.b16 %v1581, %v1580
        %v1608 = vpack.c.b16 %v1583, %v1582
        %v1609 = vpack.c.b16 %v1585, %v1584
        %1634 = vmatprep.subr.bf16.mxu0 0
        %1635 = vmatpush1.bf16.msra.mxu0 %v1593
        %1636 = vmatprep.subr.bf16.mxu0 0
        %1637 = vmatpush1.bf16.msra.mxu0 %v1592
        %1638 = vmatprep.subr.bf16.mxu0 0
        %1639 = vmatpush1.bf16.msra.mxu0 %v1591
        %1640 = vmatprep.subr.bf16.mxu0 0
        %1641 = vmatpush1.bf16.msra.mxu0 %v1590
        %1642 = vmatprep.subr.bf16.mxu0 0
        %1643 = vmatpush1.bf16.msra.mxu0 %v1589
        %1644 = vmatprep.subr.bf16.mxu0 0
        %1645 = vmatpush1.bf16.msra.mxu0 %v1588
        %1646 = vmatprep.subr.bf16.mxu0 0
        %1647 = vmatpush1.bf16.msra.mxu0 %v1587
        %1648 = vmatprep.subr.bf16.mxu0 0
        %1649 = vmatpush1.bf16.msra.mxu0 %v1586
        %1650 = vmatprep.subr.bf16.mxu0 0
        %1651 = vmatpush2.bf16.msra.mxu0 %v1601
        %1652 = vmatprep.subr.bf16.mxu0 0
        %1653 = vmatpush2.bf16.msra.mxu0 %v1600
        %1654 = vmatprep.subr.bf16.mxu0 0
        %1655 = vmatpush2.bf16.msra.mxu0 %v1599
        %1656 = vmatprep.subr.bf16.mxu0 0
        %1657 = vmatpush2.bf16.msra.mxu0 %v1598
        %1658 = vmatprep.subr.bf16.mxu0 0
        %1659 = vmatpush2.bf16.msra.mxu0 %v1597
        %1660 = vmatprep.subr.bf16.mxu0 0
        %1661 = vmatpush2.bf16.msra.mxu0 %v1596
        %1662 = vmatprep.subr.bf16.mxu0 0
        %1663 = vmatpush2.bf16.msra.mxu0 %v1595
        %1664 = vmatprep.subr.bf16.mxu0 0
        %1665 = vmatpush2.bf16.msra.mxu0 %v1594
        %1666 = vmatprep.mubr.bf16.mxu0 %v716
        %1667 = vmatmul.mubr.bf16.gmra.mxu0 %v672
        %v1668 = vpop.f32.mrf.mxu0
        %v1669 = vadd.f32 0.0, %v1668
        %v1670 = vpop.f32.mrf.mxu0
        %v1671 = vpop.f32.mrf.mxu0
        %v1672 = vadd.f32 0.0, %v1671
        %v1673 = vpop.f32.mrf.mxu0
        %1674 = vmatprep.mubr.bf16.mxu0 %v728
        %1675 = vmatmul.mubr.bf16.gmra.mxu0 %v674
        %v1676 = vpop.f32.mrf.mxu0
        %v1677 = vadd.f32 0.0, %v1676
        %v1678 = vpop.f32.mrf.mxu0
        %v1679 = vpop.f32.mrf.mxu0
        %v1680 = vadd.f32 0.0, %v1679
        %v1681 = vpop.f32.mrf.mxu0
        %1682 = vmatprep.mubr.bf16.mxu0 %v740
        %1683 = vmatmul.mubr.bf16.gmra.mxu0 %v676
        %v1684 = vpop.f32.mrf.mxu0
        %v1685 = vadd.f32 0.0, %v1684
        %v1686 = vpop.f32.mrf.mxu0
        %v1687 = vpop.f32.mrf.mxu0
        %v1688 = vadd.f32 0.0, %v1687
        %v1689 = vpop.f32.mrf.mxu0
        %1690 = vmatprep.mubr.bf16.mxu0 %v752
        %1691 = vmatmul.mubr.bf16.gmra.mxu0 %v678
        %v1692 = vpop.f32.mrf.mxu0
        %v1693 = vadd.f32 0.0, %v1692
        %v1694 = vpop.f32.mrf.mxu0
        %v1695 = vpop.f32.mrf.mxu0
        %v1696 = vadd.f32 0.0, %v1695
        %v1697 = vpop.f32.mrf.mxu0
        %1698 = vdwg.mxu0
        %1699 = vmatprep.subr.bf16.mxu0 0
        %1700 = vmatpush1.bf16.msra.mxu0 %v1609
        %1701 = vmatprep.subr.bf16.mxu0 0
        %1702 = vmatpush1.bf16.msra.mxu0 %v1608
        %1703 = vmatprep.subr.bf16.mxu0 0
        %1704 = vmatpush1.bf16.msra.mxu0 %v1607
        %1705 = vmatprep.subr.bf16.mxu0 0
        %1706 = vmatpush1.bf16.msra.mxu0 %v1606
        %1707 = vmatprep.subr.bf16.mxu0 0
        %1708 = vmatpush1.bf16.msra.mxu0 %v1605
        %1709 = vmatprep.subr.bf16.mxu0 0
        %1710 = vmatpush1.bf16.msra.mxu0 %v1604
        %1711 = vmatprep.subr.bf16.mxu0 0
        %1712 = vmatpush1.bf16.msra.mxu0 %v1603
        %1713 = vmatprep.subr.bf16.mxu0 0
        %1714 = vmatpush1.bf16.msra.mxu0 %v1602
        %1715 = vmatprep.subr.bf16.mxu0 0
        %1716 = vmatpush2.bf16.msra.mxu0 0
        %1717 = vmatprep.subr.bf16.mxu0 0
        %1718 = vmatpush2.bf16.msra.mxu0 0
        %1719 = vmatprep.subr.bf16.mxu0 0
        %1720 = vmatpush2.bf16.msra.mxu0 0
        %1721 = vmatprep.subr.bf16.mxu0 0
        %1722 = vmatpush2.bf16.msra.mxu0 0
        %1723 = vmatprep.subr.bf16.mxu0 0
        %1724 = vmatpush2.bf16.msra.mxu0 0
        %1725 = vmatprep.subr.bf16.mxu0 0
        %1726 = vmatpush2.bf16.msra.mxu0 0
        %1727 = vmatprep.subr.bf16.mxu0 0
        %1728 = vmatpush2.bf16.msra.mxu0 0
        %1729 = vmatprep.subr.bf16.mxu0 0
        %1730 = vmatpush2.bf16.msra.mxu0 0
        %1731 = vmatprep.mubr.bf16.mxu0 0
        %1732 = vmatmul.mubr.bf16.gmra.mxu0 %v780
        %v1733 = vpop.f32.mrf.mxu0
        %v1734 = vadd.f32 %v1669, %v1733
        %v1735 = vpop.f32.mrf.mxu0
        %v1736 = vpop.f32.mrf.mxu0
        %v1737 = vadd.f32 %v1672, %v1736
        %v1738 = vpop.f32.mrf.mxu0
        %1739 = vmatprep.mubr.bf16.mxu0 0
        %1740 = vmatmul.mubr.bf16.gmra.mxu0 %v783
        %v1741 = vpop.f32.mrf.mxu0
        %v1742 = vadd.f32 %v1677, %v1741
        %v1743 = vpop.f32.mrf.mxu0
        %v1744 = vpop.f32.mrf.mxu0
        %v1745 = vadd.f32 %v1680, %v1744
        %v1746 = vpop.f32.mrf.mxu0
        %1747 = vmatprep.mubr.bf16.mxu0 0
        %1748 = vmatmul.mubr.bf16.gmra.mxu0 %v786
        %v1749 = vpop.f32.mrf.mxu0
        %v1750 = vadd.f32 %v1685, %v1749
        %v1751 = vpop.f32.mrf.mxu0
        %v1752 = vpop.f32.mrf.mxu0
        %v1753 = vadd.f32 %v1688, %v1752
        %v1754 = vpop.f32.mrf.mxu0
        %1755 = vmatprep.mubr.bf16.mxu0 0
        %1756 = vmatmul.mubr.bf16.gmra.mxu0 %v789
        %v1757 = vpop.f32.mrf.mxu0
        %v1758 = vadd.f32 %v1693, %v1757
        %v1759 = vpop.f32.mrf.mxu0
        %v1760 = vpop.f32.mrf.mxu0
        %v1761 = vadd.f32 %v1696, %v1760
        %v1762 = vpop.f32.mrf.mxu0
        %1763 = vdwg.mxu0
        %v1764 = vadd.f32 %v1411, %v1734
        %v1765 = vadd.f32 %v1414, %v1737
        %v1766 = vadd.f32 %v1419, %v1742
        %v1767 = vadd.f32 %v1422, %v1745
        %v1768 = vadd.f32 %v1427, %v1750
        %v1769 = vadd.f32 %v1430, %v1753
        %v1770 = vadd.f32 %v1435, %v1758
        %v1771 = vadd.f32 %v1438, %v1761
        %v1772 = vld [vmem:[%s3] sm:$0x1]
        %v1774 = vlaneseq
        %v1775 = vshrl.u32 %v1774, 7
        %v1776 = vsub.s32 0, %v1775
        %v1777 = vrot.slane %v1772, %v1776
        %v1779 = vadd.f32 %v1764, %v1777
        %v1780 = vadd.f32 %v1765, %v1777
        %v1781 = vadd.f32 %v1766, %v1777
        %v1782 = vadd.f32 %v1767, %v1777
        %v1783 = vadd.f32 %v1768, %v1777
        %v1784 = vadd.f32 %v1769, %v1777
        %v1785 = vadd.f32 %v1770, %v1777
        %v1786 = vadd.f32 %v1771, %v1777
        %1787 = vst [vmem:[%s383] sm:$0xff] %v1779
        %1788 = vst [vmem:[%s383 + $0x8] sm:$0xff] %v1780
        %1789 = vst [vmem:[%s383 + $0x10] sm:$0xff] %v1781
        %1790 = vst [vmem:[%s383 + $0x18] sm:$0xff] %v1782
        %1791 = vst [vmem:[%s383 + $0x20] sm:$0xff] %v1783
        %1792 = vst [vmem:[%s383 + $0x28] sm:$0xff] %v1784
        %1793 = vst [vmem:[%s383 + $0x30] sm:$0xff] %v1785
        %1794 = vst [vmem:[%s383 + $0x38] sm:$0xff] %v1786
        %s1795 = sand.u32 %s219, 1
        %s1796 = scalar_lea.sflag [#allocation3], %s1795
        %s1797 = sand.u32 %s219, 1
        %s1798 = smul.addr %s1797, 64
        %s1799 = scalar_lea.vmem [#allocation2], %s1798
        // Predicated region
        $region49: #{tpu_custom_call.1} parent=47 // pred_check
          %p1800 = pneg %p229
        $region50: #{tpu_custom_call.1} parent=47 // pred_check_branch
          %1802 = sbr.rel (%p1800) target = $region52
        $region51: #{tpu_custom_call.1} parent=47 // pred_region
          %s1803 = smul.u32 4, %s26
          %s1805 = ssub.s32 1024, 1024
          %1806 = vsyncadd %s1796, %s1805
          %s1807 = smul.addr %s1803, 2
          %s1808 = smul.addr %s25, 32
          %s1809 = sadd.s32 %s1807, %s1808
          %s1810 = smul.addr %s1809, 128
          %s1811 = scalar_lea.hbm %s7, %s1810
          %s1812 = sshll.u32 %s1799, 4
          %s1813 = int_to_ptr.vmem [resolvable:$true] %s1812
          %1818 = dma.vmem_to_hbm [thread:$0]  %s1813, 1024, %s1811, %s1796, 128, 128, 8
        $region52: #{tpu_custom_call.1} parent=47 // pred_fallthru
          _
      $region48: #{tpu_custom_call.1} parent=5 // pred_fallthru
        _
      %p1819 = scmp.le.s32.totalorder 2, %s16
      // Predicated region
      $region53: #{tpu_custom_call.1} parent=5 // pred_check
        %p1820 = pneg %p1819
      $region54: #{tpu_custom_call.1} parent=5 // pred_check_branch
        %1822 = sbr.rel (%p1820) target = $region56
      $region55: #{tpu_custom_call.1} parent=5 // pred_region
        %s1823 = ssub.s32 %s16, 2
        // Predicated region
        $region57: #{tpu_custom_call.1} parent=55 // pred_check
          %p1824 = pneg %p235
        $region58: #{tpu_custom_call.1} parent=55 // pred_check_branch
          %1826 = sbr.rel (%p1824) target = $region60
        $region59: #{tpu_custom_call.1} parent=55 // pred_region
          %s1827 = sand.u32 %s220, 1
          %s1828 = scalar_lea.sflag [#allocation3], %s1827
          %s1829 = sand.u32 %s220, 1
          %s1830 = smul.addr %s1829, 64
          %s1831 = scalar_lea.vmem [#allocation2], %s1830
          %1832 = dma.done %s1828, 1024
        $region60: #{tpu_custom_call.1} parent=55 // pred_fallthru
          _
      $region56: #{tpu_custom_call.1} parent=5 // pred_fallthru
        _
    $region6: #{tpu_custom_call.1} parent=1 // loop_footer
      %s20 = sadd.s32 1, %s16
    $region7: #{tpu_custom_call.1} parent=1 // loop_footer_branch
      %15 = sbr.rel target = $region3
    $region8: #{tpu_custom_call.1} parent=1 // loop_exit
      _
    %1833 = vsyncpa [#allocation3], 1
    %s1834 = scalar_lea.sflag [#allocation3], 1
    %1835 = vsyncpa %s1834, 1

</llo_original>
